<compile_context>
chip_gen: v5e
topology: v5e:2x2
jax: 0.10.0
libtpu: 0.0.40
codegen_flags: <defaults>
</compile_context>

<pallas_src>
import functools

import jax
import jax.numpy as jnp
from jax.experimental import pallas as pl
from jax.experimental.pallas import tpu as pltpu


_VMEM_LIMIT = 32 * 1024 * 1024          # scoped-VMEM limit; safe on v5e/v6e/v7x
_TILE_VMEM_BUDGET = 16 * 1024 * 1024    # budget for streamed x + f32 intermediates
_TILE_M_MAX = 1024                      # knee of the per-grid-step overhead curve


def _round_up(n: int, m: int) -> int:
    return (n + m - 1) // m * m


def _cdiv(a: int, b: int) -> int:
    return -(-a // b)


def _tiling(B: int, F: int, H: int, x_itemsize: int):
    """Batch tile (multiple of 128 rows) from a VMEM byte budget, aiming for
    >= 8 grid steps so the DMA pipeline and both v7x TensorCores have work."""
    per_row = 2 * F * x_itemsize + 3 * H * 4   # dbl-buffered x tile + h + h*w2 intermediates
    tm_vmem = max(128, (_TILE_VMEM_BUDGET // max(per_row, 1)) // 128 * 128)
    tm_par = max(128, _round_up(_cdiv(B, 8), 128))
    tm = min(_TILE_M_MAX, tm_vmem, tm_par)
    num_tiles = max(1, _cdiv(B, tm))
    return tm, num_tiles


def _log_sigmoid(z):
    # Numerically stable log(sigmoid(z)) = min(z, 0) - log(1 + exp(-|z|)).
    return jnp.minimum(z, 0.0) - jnp.log(1.0 + jnp.exp(-jnp.abs(z)))


def _mlp_block(x_ref, w1_ref, b1_ref, w2_ref, b2_ref, *, sub_rows):
    # Layer 1 on the MXU: bf16 inputs, f32 accumulation (astype is a no-op if x
    # is already bf16 upstream).
    x = x_ref[...].astype(jnp.bfloat16)                               # [TM, F]
    h = jnp.dot(x, w1_ref[...], preferred_element_type=jnp.float32)   # [TM, H] f32
    h = jnp.maximum(h + b1_ref[...], 0.0)                             # bias + ReLU (VPU)
    # Layer 2 (H -> 1) as a lane reduce, emitted lane-dense: batch row r of this
    # tile maps to (r // 128, r % 128) of a [sub_rows, 128] result so stores and
    # the downstream BCE chain run at full 128-lane width.
    hidden = w1_ref.shape[1]
    h3 = h.reshape(sub_rows, 128, hidden)                              # major-dim split (layout-free)
    logits = jnp.sum(h3 * w2_ref[...], axis=-1) + b2_ref[...]          # [sub_rows, 128] f32
    return logits


def _mlp_kernel(x_ref, w1_ref, b1_ref, w2_ref, b2_ref, logits_ref, *, sub_rows):
    logits_ref[...] = _mlp_block(x_ref, w1_ref, b1_ref, w2_ref, b2_ref,
                                 sub_rows=sub_rows)


def _mlp_loss_kernel(x_ref, w1_ref, b1_ref, w2_ref, b2_ref, y_ref,
                     logits_ref, loss_ref, *, batch_size, tile_m, sub_rows):
    i = pl.program_id(0)
    logits = _mlp_block(x_ref, w1_ref, b1_ref, w2_ref, b2_ref, sub_rows=sub_rows)
    logits_ref[...] = logits

    # BCE computed from logits (equivalent to torch.nn.BCELoss on sigmoid(logits),
    # including the -100 clamp, without the sigmoid->log precision cliff).
    y = y_ref[...]                                                     # [sub_rows, 128]
    log_p = jnp.maximum(_log_sigmoid(logits), -100.0)
    log_1mp = jnp.maximum(_log_sigmoid(-logits), -100.0)
    per_example = -(y * log_p + (1.0 - y) * log_1mp)                   # [sub_rows, 128]

    # Mask rows past the real batch (the last x block may be partial and its
    # out-of-bounds rows hold garbage): jnp.where, not multiply, so Inf/NaN in
    # masked rows cannot poison the reduction done in the wrapper.
    sub = jax.lax.broadcasted_iota(jnp.int32, per_example.shape, 0)
    lane = jax.lax.broadcasted_iota(jnp.int32, per_example.shape, 1)
    rows = i * tile_m + sub * 128 + lane
    loss_ref[...] = jnp.where(rows < batch_size, per_example, 0.0)


def _weight_specs(F: int, H: int):
    # Resident across the (parallel) batch grid axis via constant index maps.
    return [
        pl.BlockSpec((F, H), lambda i: (0, 0)),   # w1_t (bf16)
        pl.BlockSpec((1, H), lambda i: (0, 0)),   # b1
        pl.BlockSpec((1, H), lambda i: (0, 0)),   # w2 row
        pl.BlockSpec((1, 1), lambda i: (0, 0)),   # b2
    ]


@jax.jit
def _forward_core(x, w1_t, b1, w2_row, b2):
    B, F = x.shape
    H = w1_t.shape[1]
    tm, num_tiles = _tiling(B, F, H, x.dtype.itemsize)
    sub_rows = tm // 128

    # Pad x only when the whole batch is smaller than one tile (cheap). For
    # B >= tm the last block is partial; Pallas masks the OOB rows, so the big
    # x stream never takes an extra HBM round trip through jnp.pad.
    if B < tm:
        x = jnp.pad(x, ((0, tm - B), (0, 0)))

    kernel = functools.partial(_mlp_kernel, sub_rows=sub_rows)
    flops = 2 * num_tiles * tm * F * H + 4 * num_tiles * tm * H
    bytes_accessed = (B * F * x.dtype.itemsize + F * H * w1_t.dtype.itemsize
                      + (2 * H + 1) * 4 + num_tiles * tm * 4)

    logits_ld = pl.pallas_call(
        kernel,
        out_shape=jax.ShapeDtypeStruct((num_tiles, sub_rows, 128), jnp.float32),
        grid=(num_tiles,),
        in_specs=[pl.BlockSpec((tm, F), lambda i: (i, 0))] + _weight_specs(F, H),
        out_specs=pl.BlockSpec((None, sub_rows, 128), lambda i: (i, 0, 0)),
        compiler_params=pltpu.CompilerParams(
            dimension_semantics=("parallel",),
            vmem_limit_bytes=_VMEM_LIMIT,
        ),
        cost_estimate=pl.CostEstimate(
            flops=flops, transcendentals=0, bytes_accessed=bytes_accessed),
    )(x, w1_t, b1, w2_row, b2)
    return logits_ld.reshape(-1)[:B]


@jax.jit
def _forward_core_with_loss(x, w1_t, b1, w2_row, b2, y):
    B, F = x.shape
    H = w1_t.shape[1]
    tm, num_tiles = _tiling(B, F, H, x.dtype.itemsize)
    sub_rows = tm // 128

    if B < tm:
        x = jnp.pad(x, ((0, tm - B), (0, 0)))

    # y is tiny (B floats): pre-shape it lane-dense to match the logits layout so
    # its loads are unmasked and 128-lane wide (padding here is negligible).
    y_flat = y.astype(jnp.float32).reshape(-1)
    y_ld = jnp.pad(y_flat, (0, num_tiles * tm - B)).reshape(num_tiles, sub_rows, 128)

    kernel = functools.partial(_mlp_loss_kernel, batch_size=B, tile_m=tm,
                               sub_rows=sub_rows)
    flops = 2 * num_tiles * tm * F * H + 12 * num_tiles * tm * H
    bytes_accessed = (B * F * x.dtype.itemsize + F * H * w1_t.dtype.itemsize
                      + (2 * H + 1) * 4 + 3 * num_tiles * tm * 4)

    logits_ld, per_example = pl.pallas_call(
        kernel,
        out_shape=(
            jax.ShapeDtypeStruct((num_tiles, sub_rows, 128), jnp.float32),
            jax.ShapeDtypeStruct((num_tiles, sub_rows, 128), jnp.float32),
        ),
        grid=(num_tiles,),
        in_specs=[pl.BlockSpec((tm, F), lambda i: (i, 0))] + _weight_specs(F, H)
                 + [pl.BlockSpec((None, sub_rows, 128), lambda i: (i, 0, 0))],
        out_specs=(
            pl.BlockSpec((None, sub_rows, 128), lambda i: (i, 0, 0)),
            pl.BlockSpec((None, sub_rows, 128), lambda i: (i, 0, 0)),
        ),
        compiler_params=pltpu.CompilerParams(
            # No cross-iteration accumulation -> batch axis is parallel (v7x megacore).
            dimension_semantics=("parallel",),
            vmem_limit_bytes=_VMEM_LIMIT,
        ),
        cost_estimate=pl.CostEstimate(
            flops=flops, transcendentals=4 * num_tiles * tm,
            bytes_accessed=bytes_accessed),
    )(x, w1_t, b1, w2_row, b2, y_ld)

    logits = logits_ld.reshape(-1)[:B]
    loss = jnp.sum(per_example) / jnp.float32(B)   # masked entries are exactly 0
    return logits, loss


class WiCClassifierPallas:
    """JAX/Pallas port of the PyTorch WiCClassifier forward pass."""
    # TODO(synk): global_epoch / training bookkeeping is non-tensor state, not ported.

    def __init__(self, input_features: int, hidden_size: int, key):
        k1, k2, k3, k4 = jax.random.split(key, 4)
        # Deterministic init mimicking nn.Linear's uniform(-1/sqrt(fan_in), 1/sqrt(fan_in)).
        bound1 = 1.0 / (input_features ** 0.5)
        bound2 = 1.0 / (hidden_size ** 0.5)
        w1 = jax.random.uniform(k1, (hidden_size, input_features), jnp.float32,
                                -bound1, bound1)
        b1 = jax.random.uniform(k2, (hidden_size,), jnp.float32, -bound1, bound1)
        w2 = jax.random.uniform(k3, (1, hidden_size), jnp.float32, -bound2, bound2)
        b2 = jax.random.uniform(k4, (1,), jnp.float32, -bound2, bound2)
        # First-layer weight pre-transposed and stored bf16 (MXU input, half the DMA).
        self.w1_t = jnp.transpose(w1).astype(jnp.bfloat16)     # [F, H] bf16
        self.b1 = b1.reshape(1, hidden_size)                   # [1, H] f32
        self.w2_row = w2.reshape(1, hidden_size)               # [1, H] f32 (mul-reduce row)
        self.b2 = b2.reshape(1, 1)                             # [1, 1] f32

    def forward(self, x, y=None):
        if y is None:
            logits = _forward_core(x, self.w1_t, self.b1, self.w2_row, self.b2)
            return {"logits": logits, "probabilities": jax.nn.sigmoid(logits)}
        logits, loss = _forward_core_with_loss(
            x, self.w1_t, self.b1, self.w2_row, self.b2, y)
        return {"logits": logits, "probabilities": jax.nn.sigmoid(logits), "loss": loss}


def _reference(model, x, y):
    # Mirrors the kernel math (bf16 matmul inputs, f32 accumulation, BCE w/ -100 clamp).
    h = jnp.maximum(
        jnp.dot(x.astype(jnp.bfloat16), model.w1_t,
                preferred_element_type=jnp.float32) + model.b1, 0.0)
    logits = jnp.sum(h * model.w2_row, axis=-1) + model.b2[0, 0]
    probs = jax.nn.sigmoid(logits)
    log_p = jnp.maximum(jax.nn.log_sigmoid(logits), -100.0)
    log_1mp = jnp.maximum(jax.nn.log_sigmoid(-logits), -100.0)
    loss = jnp.mean(-(y * log_p + (1.0 - y) * log_1mp))
    return logits, probs, loss


if __name__ == "__main__":
    F, H = 32, 32  # input_features, hidden_size

    key = jax.random.PRNGKey(0)
    k_model, k_x, k_y, k_x2, k_y2 = jax.random.split(key, 5)
    model = WiCClassifierPallas(input_features=F, hidden_size=H, key=k_model)

    # --- small batch (single padded tile) ---
    B = 8
    x = jax.random.normal(k_x, (B, F), dtype=jnp.float32)
    y = jax.random.bernoulli(k_y, 0.5, (B,)).astype(jnp.float32)

    out = model.forward(x, y)
    out_nolabel = model.forward(x)
    jax.block_until_ready((out, out_nolabel))

    logits_ref, probs_ref, loss_ref = _reference(model, x, y)
    assert out["logits"].shape == (B,)
    assert out["probabilities"].shape == (B,)
    assert jnp.allclose(out["logits"], logits_ref, atol=1e-4, rtol=1e-4)
    assert jnp.allclose(out["probabilities"], probs_ref, atol=1e-4, rtol=1e-4)
    assert jnp.allclose(out["loss"], loss_ref, atol=1e-4, rtol=1e-4)
    assert jnp.allclose(out_nolabel["logits"], logits_ref, atol=1e-4, rtol=1e-4)

    # --- multi-tile batch with a partial last block (no wrapper pad of x) ---
    B2 = 300
    x2 = jax.random.normal(k_x2, (B2, F), dtype=jnp.float32)
    y2 = jax.random.bernoulli(k_y2, 0.5, (B2,)).astype(jnp.float32)
    out2 = model.forward(x2, y2)
    jax.block_until_ready(out2)

    logits_ref2, probs_ref2, loss_ref2 = _reference(model, x2, y2)
    assert out2["logits"].shape == (B2,)
    assert jnp.allclose(out2["logits"], logits_ref2, atol=1e-4, rtol=1e-4)
    assert jnp.allclose(out2["probabilities"], probs_ref2, atol=1e-4, rtol=1e-4)
    assert jnp.allclose(out2["loss"], loss_ref2, atol=1e-4, rtol=1e-4)

    print("KERNEL_OK")
</pallas_src>

<mosaic_0001>
module attributes {stable_mosaic.version = 11 : i64} {
  func.func @_mlp_loss_kernel(%arg0: i32, %arg1: memref<128x32xf32, #tpu.memory_space<vmem>>, %arg2: memref<32x32xbf16, #tpu.memory_space<vmem>>, %arg3: memref<1x32xf32, #tpu.memory_space<vmem>>, %arg4: memref<1x32xf32, #tpu.memory_space<vmem>>, %arg5: memref<1x1xf32, #tpu.memory_space<vmem>>, %arg6: memref<1x1x128xf32, #tpu.memory_space<vmem>>, %arg7: memref<1x1x128xf32, #tpu.memory_space<vmem>>, %arg8: memref<1x1x128xf32, #tpu.memory_space<vmem>>) attributes {dimension_semantics = [#tpu.dimension_semantics<parallel>], iteration_bounds = array<i64: 1>, scalar_prefetch = 0 : i64, scratch_operands = 0 : i64, tpu.core_type = #tpu.core_type<tc>, window_params = [{transform_indices = @transform_0, window_bounds = array<i64: 128, 32>}, {pipeline_mode = #tpu.pipeline_mode<synchronous>, transform_indices = @transform_1, window_bounds = array<i64: 32, 32>}, {pipeline_mode = #tpu.pipeline_mode<synchronous>, transform_indices = @transform_2, window_bounds = array<i64: 1, 32>}, {pipeline_mode = #tpu.pipeline_mode<synchronous>, transform_indices = @transform_3, window_bounds = array<i64: 1, 32>}, {pipeline_mode = #tpu.pipeline_mode<synchronous>, transform_indices = @transform_4, window_bounds = array<i64: 1, 1>}, {transform_indices = @transform_5, window_bounds = array<i64: 1, 1, 128>}, {transform_indices = @transform_6, window_bounds = array<i64: 1, 1, 128>}, {transform_indices = @transform_7, window_bounds = array<i64: 1, 1, 128>}]} {
    %c0 = arith.constant 0 : index
    %c0_0 = arith.constant 0 : index
    %0 = vector.load %arg1[%c0, %c0_0] : memref<128x32xf32, #tpu.memory_space<vmem>>, vector<128x32xf32>
    %1 = arith.truncf %0 : vector<128x32xf32> to vector<128x32xbf16>
    %c0_1 = arith.constant 0 : index
    %c0_2 = arith.constant 0 : index
    %2 = vector.load %arg2[%c0_1, %c0_2] : memref<32x32xbf16, #tpu.memory_space<vmem>>, vector<32x32xbf16>
    %cst = arith.constant dense<0.000000e+00> : vector<128x32xf32>
    %3 = tpu.matmul %1, %2, %cst {dimension_numbers = #tpu.dot_dimension_numbers<[1], [0], [0], [1], [0, 0, 1, 1], [], []>} : vector<128x32xbf16>, vector<32x32xbf16>, vector<128x32xf32> -> vector<128x32xf32>
    %c0_3 = arith.constant 0 : index
    %c0_4 = arith.constant 0 : index
    %4 = vector.load %arg3[%c0_3, %c0_4] : memref<1x32xf32, #tpu.memory_space<vmem>>, vector<1x32xf32>
    %5 = vector.broadcast %4 : vector<1x32xf32> to vector<128x32xf32>
    %6 = arith.addf %3, %5 : vector<128x32xf32>
    %cst_5 = arith.constant 0.000000e+00 : f32
    %7 = vector.broadcast %cst_5 : f32 to vector<128x32xf32>
    %8 = arith.maximumf %6, %7 : vector<128x32xf32>
    %9 = vector.shape_cast %8 : vector<128x32xf32> to vector<1x128x32xf32>
    %c0_6 = arith.constant 0 : index
    %c0_7 = arith.constant 0 : index
    %10 = vector.load %arg4[%c0_6, %c0_7] : memref<1x32xf32, #tpu.memory_space<vmem>>, vector<1x32xf32>
    %11 = vector.shape_cast %10 : vector<1x32xf32> to vector<1x1x32xf32>
    %12 = vector.broadcast %11 : vector<1x1x32xf32> to vector<1x128x32xf32>
    %13 = arith.mulf %9, %12 : vector<1x128x32xf32>
    %cst_8 = arith.constant dense<0.000000e+00> : vector<1x128xf32>
    %14 = vector.multi_reduction <add>, %13, %cst_8 [2] : vector<1x128x32xf32> to vector<1x128xf32>
    %c0_9 = arith.constant 0 : index
    %c0_10 = arith.constant 0 : index
    %15 = vector.load %arg5[%c0_9, %c0_10] : memref<1x1xf32, #tpu.memory_space<vmem>>, vector<1x1xf32>
    %16 = vector.broadcast %15 : vector<1x1xf32> to vector<1x128xf32>
    %17 = arith.addf %14, %16 : vector<1x128xf32>
    %c0_11 = arith.constant 0 : index
    %c0_12 = arith.constant 0 : index
    %c0_13 = arith.constant 0 : index
    %18 = vector.load %arg7[%c0_11, %c0_12, %c0_13] : memref<1x1x128xf32, #tpu.memory_space<vmem>>, vector<1x1x128xf32>
    %19 = vector.shape_cast %18 : vector<1x1x128xf32> to vector<1x128xf32>
    %20 = vector.shape_cast %17 : vector<1x128xf32> to vector<1x1x128xf32>
    tpu.vector_store %arg7[%c0_11, %c0_12, %c0_13], %20 {strides = array<i32>} : memref<1x1x128xf32, #tpu.memory_space<vmem>>, vector<1x1x128xf32>,
    %c0_14 = arith.constant 0 : index
    %c0_15 = arith.constant 0 : index
    %c0_16 = arith.constant 0 : index
    %21 = vector.load %arg6[%c0_14, %c0_15, %c0_16] : memref<1x1x128xf32, #tpu.memory_space<vmem>>, vector<1x1x128xf32>
    %22 = vector.shape_cast %21 : vector<1x1x128xf32> to vector<1x128xf32>
    %cst_17 = arith.constant 0.000000e+00 : f32
    %23 = vector.broadcast %cst_17 : f32 to vector<1x128xf32>
    %24 = arith.minimumf %17, %23 : vector<1x128xf32>
    %25 = math.absf %17 : vector<1x128xf32>
    %cst_18 = arith.constant 0.000000e+00 : f32
    %26 = vector.broadcast %cst_18 : f32 to vector<1x128xf32>
    %27 = arith.subf %26, %25 : vector<1x128xf32>
    %28 = math.exp %27 : vector<1x128xf32>
    %cst_19 = arith.constant 1.000000e+00 : f32
    %29 = vector.broadcast %cst_19 : f32 to vector<1x128xf32>
    %30 = arith.addf %29, %28 : vector<1x128xf32>
    %31 = math.log %30 : vector<1x128xf32>
    %32 = arith.subf %24, %31 : vector<1x128xf32>
    %cst_20 = arith.constant -1.000000e+02 : f32
    %33 = vector.broadcast %cst_20 : f32 to vector<1x128xf32>
    %34 = arith.maximumf %32, %33 : vector<1x128xf32>
    %cst_21 = arith.constant 0.000000e+00 : f32
    %35 = vector.broadcast %cst_21 : f32 to vector<1x128xf32>
    %36 = arith.subf %35, %17 : vector<1x128xf32>
    %cst_22 = arith.constant 0.000000e+00 : f32
    %37 = vector.broadcast %cst_22 : f32 to vector<1x128xf32>
    %38 = arith.minimumf %36, %37 : vector<1x128xf32>
    %39 = math.absf %36 : vector<1x128xf32>
    %cst_23 = arith.constant 0.000000e+00 : f32
    %40 = vector.broadcast %cst_23 : f32 to vector<1x128xf32>
    %41 = arith.subf %40, %39 : vector<1x128xf32>
    %42 = math.exp %41 : vector<1x128xf32>
    %cst_24 = arith.constant 1.000000e+00 : f32
    %43 = vector.broadcast %cst_24 : f32 to vector<1x128xf32>
    %44 = arith.addf %43, %42 : vector<1x128xf32>
    %45 = math.log %44 : vector<1x128xf32>
    %46 = arith.subf %38, %45 : vector<1x128xf32>
    %cst_25 = arith.constant -1.000000e+02 : f32
    %47 = vector.broadcast %cst_25 : f32 to vector<1x128xf32>
    %48 = arith.maximumf %46, %47 : vector<1x128xf32>
    %49 = arith.mulf %22, %34 : vector<1x128xf32>
    %cst_26 = arith.constant 1.000000e+00 : f32
    %50 = vector.broadcast %cst_26 : f32 to vector<1x128xf32>
    %51 = arith.subf %50, %22 : vector<1x128xf32>
    %52 = arith.mulf %51, %48 : vector<1x128xf32>
    %53 = arith.addf %49, %52 : vector<1x128xf32>
    %cst_27 = arith.constant 0.000000e+00 : f32
    %54 = vector.broadcast %cst_27 : f32 to vector<1x128xf32>
    %55 = arith.subf %54, %53 : vector<1x128xf32>
    %56 = tpu.iota {dimensions = array<i32: 0>} : vector<1x128xi32>
    %57 = tpu.iota {dimensions = array<i32: 1>} : vector<1x128xi32>
    %c128_i32 = arith.constant 128 : i32
    %58 = arith.muli %arg0, %c128_i32 : i32
    %c128_i32_28 = arith.constant 128 : i32
    %59 = vector.broadcast %c128_i32_28 : i32 to vector<1x128xi32>
    %60 = arith.muli %56, %59 : vector<1x128xi32>
    %61 = vector.broadcast %58 : i32 to vector<1x128xi32>
    %62 = arith.addi %61, %60 : vector<1x128xi32>
    %63 = arith.addi %62, %57 : vector<1x128xi32>
    %c8_i32 = arith.constant 8 : i32
    %64 = vector.broadcast %c8_i32 : i32 to vector<1x128xi32>
    %65 = arith.cmpi slt, %63, %64 : vector<1x128xi32>
    %cst_29 = arith.constant 0.000000e+00 : f32
    %66 = vector.broadcast %cst_29 : f32 to vector<1x128xf32>
    %67 = arith.select %65, %55, %66 : vector<1x128xi1>, vector<1x128xf32>
    %c0_30 = arith.constant 0 : index
    %c0_31 = arith.constant 0 : index
    %c0_32 = arith.constant 0 : index
    %68 = vector.load %arg8[%c0_30, %c0_31, %c0_32] : memref<1x1x128xf32, #tpu.memory_space<vmem>>, vector<1x1x128xf32>
    %69 = vector.shape_cast %68 : vector<1x1x128xf32> to vector<1x128xf32>
    %70 = vector.shape_cast %67 : vector<1x128xf32> to vector<1x1x128xf32>
    tpu.vector_store %arg8[%c0_30, %c0_31, %c0_32], %70 {strides = array<i32>} : memref<1x1x128xf32, #tpu.memory_space<vmem>>, vector<1x1x128xf32>,
    return
  }
  func.func @transform_0(%arg0: i32) -> (i32, i32) {
    %c0_i32 = arith.constant 0 : i32
    %c0_i32_0 = arith.constant 0 : i32
    return %arg0, %c0_i32 : i32, i32
  }
  func.func @transform_1(%arg0: i32) -> (i32, i32) {
    %c0_i32 = arith.constant 0 : i32
    %c0_i32_0 = arith.constant 0 : i32
    %c0_i32_1 = arith.constant 0 : i32
    return %c0_i32, %c0_i32_0 : i32, i32
  }
  func.func @transform_2(%arg0: i32) -> (i32, i32) {
    %c0_i32 = arith.constant 0 : i32
    %c0_i32_0 = arith.constant 0 : i32
    %c0_i32_1 = arith.constant 0 : i32
    return %c0_i32, %c0_i32_0 : i32, i32
  }
  func.func @transform_3(%arg0: i32) -> (i32, i32) {
    %c0_i32 = arith.constant 0 : i32
    %c0_i32_0 = arith.constant 0 : i32
    %c0_i32_1 = arith.constant 0 : i32
    return %c0_i32, %c0_i32_0 : i32, i32
  }
  func.func @transform_4(%arg0: i32) -> (i32, i32) {
    %c0_i32 = arith.constant 0 : i32
    %c0_i32_0 = arith.constant 0 : i32
    %c0_i32_1 = arith.constant 0 : i32
    return %c0_i32, %c0_i32_0 : i32, i32
  }
  func.func @transform_5(%arg0: i32) -> (i32, i32, i32) {
    %c0_i32 = arith.constant 0 : i32
    %c0_i32_0 = arith.constant 0 : i32
    %c0_i32_1 = arith.constant 0 : i32
    return %arg0, %c0_i32, %c0_i32_0 : i32, i32, i32
  }
  func.func @transform_6(%arg0: i32) -> (i32, i32, i32) {
    %c0_i32 = arith.constant 0 : i32
    %c0_i32_0 = arith.constant 0 : i32
    %c0_i32_1 = arith.constant 0 : i32
    return %arg0, %c0_i32, %c0_i32_0 : i32, i32, i32
  }
  func.func @transform_7(%arg0: i32) -> (i32, i32, i32) {
    %c0_i32 = arith.constant 0 : i32
    %c0_i32_0 = arith.constant 0 : i32
    %c0_i32_1 = arith.constant 0 : i32
    return %arg0, %c0_i32, %c0_i32_0 : i32, i32, i32
  }
}

</mosaic_0001>

<llo_original>
// kernel: _forward_core_with_loss.1
$region0: #{_forward_core_with_loss.1}
  #allocation0 [shape = 'u32[]', space=smem, size = 0x4, offset = 0x4, fixed_abs, tag = 'smem constant byte address 0x4 - core index']
  #allocation1 [shape = 'u32[72,128]{1,0:T(1,128)}', space=vmem, size = 0x9000, scoped, tag = 'internal scratch']
  #allocation2 [shape = 'f32[1,1]{1,0:T(1,128)S(1)}', space=vmem, size = 0x200, scoped, tag = 'scoped memory for _forward_core_with_loss.1']
  %s0 = inlined_call_operand.vmem [shape: f32[128,32], index: 0, kind: input, shape index: {}]
  %s1 = inlined_call_operand.vmem [shape: bf16[32,32], index: 1, kind: input, shape index: {}]
  %s2 = inlined_call_operand.vmem [shape: f32[1,32], index: 2, kind: input, shape index: {}]
  %s3 = inlined_call_operand.vmem [shape: f32[1,32], index: 3, kind: input, shape index: {}]
  %s4 = inlined_call_operand.<no memory space> [shape: f32[1,1], index: 4, kind: input, shape index: {}]
  %s5 = inlined_call_operand.vmem [shape: f32[1,1,128], index: 5, kind: input, shape index: {}]
  %s6 = inlined_call_operand.vmem [shape: f32[1,1,128], index: 6, kind: output, shape index: {0}]
  %s7 = inlined_call_operand.vmem [shape: f32[1,1,128], index: 7, kind: output, shape index: {1}]
  %8 = xla_tuple %s6, %s7
  %s9 = sld [smem:[#allocation0]]
  $region42: #{_forward_core_with_loss.1} parent=0
    _
  %s11 = ssub.s32 1, %s9
  %s12 = scalar_select 0, %s11, %s9
  %v13 = vstv %s4
  %14 = vst [vmem:[#allocation2] sm:$0x1] %v13
  // Predicated region
  $region2: #{_forward_core_with_loss.1} parent=0 // pred_check
    _
  $region3: #{_forward_core_with_loss.1} parent=0 // pred_check_branch
    %16 = sbr.rel (0) target = $region5
  $region4: #{_forward_core_with_loss.1} parent=0 // pred_region
    _
  $region5: #{_forward_core_with_loss.1} parent=0 // pred_fallthru
    _
  // Predicated region
  $region6: #{_forward_core_with_loss.1} parent=0 // pred_check
    _
  $region7: #{_forward_core_with_loss.1} parent=0 // pred_check_branch
    %18 = sbr.rel (0) target = $region9
  $region8: #{_forward_core_with_loss.1} parent=0 // pred_region
    _
  $region9: #{_forward_core_with_loss.1} parent=0 // pred_fallthru
    _
  // Predicated region
  $region10: #{_forward_core_with_loss.1} parent=0 // pred_check
    _
  $region11: #{_forward_core_with_loss.1} parent=0 // pred_check_branch
    %20 = sbr.rel (0) target = $region13
  $region12: #{_forward_core_with_loss.1} parent=0 // pred_region
    _
  $region13: #{_forward_core_with_loss.1} parent=0 // pred_fallthru
    _
  // Predicated region
  $region14: #{_forward_core_with_loss.1} parent=0 // pred_check
    _
  $region15: #{_forward_core_with_loss.1} parent=0 // pred_check_branch
    %22 = sbr.rel (0) target = $region17
  $region16: #{_forward_core_with_loss.1} parent=0 // pred_region
    _
  $region17: #{_forward_core_with_loss.1} parent=0 // pred_fallthru
    _
  // Predicated region
  $region18: #{_forward_core_with_loss.1} parent=0 // pred_check
    _
  $region19: #{_forward_core_with_loss.1} parent=0 // pred_check_branch
    %24 = sbr.rel (0) target = $region21
  $region20: #{_forward_core_with_loss.1} parent=0 // pred_region
    _
  $region21: #{_forward_core_with_loss.1} parent=0 // pred_fallthru
    _
  // Predicated region
  $region22: #{_forward_core_with_loss.1} parent=0 // pred_check
    _
  $region23: #{_forward_core_with_loss.1} parent=0 // pred_check_branch
    %26 = sbr.rel (0) target = $region25
  $region24: #{_forward_core_with_loss.1} parent=0 // pred_region
    _
  $region25: #{_forward_core_with_loss.1} parent=0 // pred_fallthru
    _
  %v28 = vld [vmem:[%s0] sm:$0xff]
  %v29 = vld [vmem:[%s0 + $0x8] sm:$0xff]
  %v30 = vld [vmem:[%s0 + $0x10] sm:$0xff]
  %v31 = vld [vmem:[%s0 + $0x18] sm:$0xff]
  %v32 = vld [vmem:[%s0 + $0x20] sm:$0xff]
  %v33 = vld [vmem:[%s0 + $0x28] sm:$0xff]
  %v34 = vld [vmem:[%s0 + $0x30] sm:$0xff]
  %v35 = vld [vmem:[%s0 + $0x38] sm:$0xff]
  %v36 = vld [vmem:[%s0 + $0x40] sm:$0xff]
  %v37 = vld [vmem:[%s0 + $0x48] sm:$0xff]
  %v38 = vld [vmem:[%s0 + $0x50] sm:$0xff]
  %v39 = vld [vmem:[%s0 + $0x58] sm:$0xff]
  %v40 = vld [vmem:[%s0 + $0x60] sm:$0xff]
  %v41 = vld [vmem:[%s0 + $0x68] sm:$0xff]
  %v42 = vld [vmem:[%s0 + $0x70] sm:$0xff]
  %v43 = vld [vmem:[%s0 + $0x78] sm:$0xff]
  %v44 = vpack.c.bf16 %v29, %v28
  %v45 = vpack.c.bf16 %v31, %v30
  %v46 = vpack.c.bf16 %v33, %v32
  %v47 = vpack.c.bf16 %v35, %v34
  %v48 = vpack.c.bf16 %v37, %v36
  %v49 = vpack.c.bf16 %v39, %v38
  %v50 = vpack.c.bf16 %v41, %v40
  %v51 = vpack.c.bf16 %v43, %v42
  %v52 = vld [vmem:[%s1] sm:$0xf]
  %v53 = vld [vmem:[%s1 + $0x4] sm:$0xf]
  %v54 = vld [vmem:[%s1 + $0x8] sm:$0xf]
  %v55 = vld [vmem:[%s1 + $0xc] sm:$0xf]
  %v56 = vld [vmem:[%s2] sm:$0x1]
  %v58 = vperm.slane %v56, 0
  %v64 = vunpack.c.l.b16 %v52
  %v65 = vunpack.c.l.b16 %v53
  %v66 = vunpack.c.l.b16 %v54
  %v67 = vunpack.c.l.b16 %v55
  %v68 = vpack.c.b16 %v65, %v64
  %v69 = vpack.c.b16 %v67, %v66
  %vm72 = vcmask 261120
  %v74 = vsel %vm72, %v44, 0
  %v77 = vsel %vm72, %v45, 0
  %v80 = vsel %vm72, %v46, 0
  %v83 = vsel %vm72, %v47, 0
  %v86 = vsel %vm72, %v48, 0
  %v89 = vsel %vm72, %v49, 0
  %v92 = vsel %vm72, %v50, 0
  %v95 = vsel %vm72, %v51, 0
  %97 = vmatpush.bf16.msra.mxu0 0
  %98 = vmatpush.bf16.msra.mxu0 0
  %99 = vmatpush.bf16.msra.mxu0 0
  %100 = vmatpush.bf16.msra.mxu0 0
  %101 = vmatpush.bf16.msra.mxu0 0
  %102 = vmatpush.bf16.msra.mxu0 0
  %103 = vmatpush.bf16.msra.mxu0 %v69
  %104 = vmatpush.bf16.msra.mxu0 %v68
  %105 = vmatmul.bf16.gmra.mxu0 %v74
  %v106 = vpop.f32.mrf.mxu0
  %v107 = vadd.f32 %v58, %v106
  %v108 = vpop.f32.mrf.mxu0
  %v109 = vadd.f32 %v58, %v108
  %110 = vmatmul.bf16.gmra.mxu0 %v77
  %v111 = vpop.f32.mrf.mxu0
  %v112 = vadd.f32 %v58, %v111
  %v113 = vpop.f32.mrf.mxu0
  %v114 = vadd.f32 %v58, %v113
  %115 = vmatmul.bf16.gmra.mxu0 %v80
  %v116 = vpop.f32.mrf.mxu0
  %v117 = vadd.f32 %v58, %v116
  %v118 = vpop.f32.mrf.mxu0
  %v119 = vadd.f32 %v58, %v118
  %120 = vmatmul.bf16.gmra.mxu0 %v83
  %v121 = vpop.f32.mrf.mxu0
  %v122 = vadd.f32 %v58, %v121
  %v123 = vpop.f32.mrf.mxu0
  %v124 = vadd.f32 %v58, %v123
  %125 = vmatmul.bf16.gmra.mxu0 %v86
  %v126 = vpop.f32.mrf.mxu0
  %v127 = vadd.f32 %v58, %v126
  %v128 = vpop.f32.mrf.mxu0
  %v129 = vadd.f32 %v58, %v128
  %130 = vmatmul.bf16.gmra.mxu0 %v89
  %v131 = vpop.f32.mrf.mxu0
  %v132 = vadd.f32 %v58, %v131
  %v133 = vpop.f32.mrf.mxu0
  %v134 = vadd.f32 %v58, %v133
  %135 = vmatmul.bf16.gmra.mxu0 %v92
  %v136 = vpop.f32.mrf.mxu0
  %v137 = vadd.f32 %v58, %v136
  %v138 = vpop.f32.mrf.mxu0
  %v139 = vadd.f32 %v58, %v138
  %140 = vmatmul.bf16.gmra.mxu0 %v95
  %v141 = vpop.f32.mrf.mxu0
  %v142 = vadd.f32 %v58, %v141
  %v143 = vpop.f32.mrf.mxu0
  %v144 = vadd.f32 %v58, %v143
  %145 = vdwg.mxu0
  %v146 = vmax.f32 %v107, 0.0
  %v147 = vmax.f32 %v109, 0.0
  %v148 = vmax.f32 %v112, 0.0
  %v149 = vmax.f32 %v114, 0.0
  %v150 = vmax.f32 %v117, 0.0
  %v151 = vmax.f32 %v119, 0.0
  %v152 = vmax.f32 %v122, 0.0
  %v153 = vmax.f32 %v124, 0.0
  %v154 = vmax.f32 %v127, 0.0
  %v155 = vmax.f32 %v129, 0.0
  %v156 = vmax.f32 %v132, 0.0
  %v157 = vmax.f32 %v134, 0.0
  %v158 = vmax.f32 %v137, 0.0
  %v159 = vmax.f32 %v139, 0.0
  %v160 = vmax.f32 %v142, 0.0
  %v161 = vmax.f32 %v144, 0.0
  %v162 = vld [vmem:[%s3] sm:$0x1]
  %v164 = vperm.slane %v162, 0
  %v166 = vmul.f32 %v146, %v164
  %v167 = vmul.f32 %v147, %v164
  %v168 = vmul.f32 %v148, %v164
  %v169 = vmul.f32 %v149, %v164
  %v170 = vmul.f32 %v150, %v164
  %v171 = vmul.f32 %v151, %v164
  %v172 = vmul.f32 %v152, %v164
  %v173 = vmul.f32 %v153, %v164
  %v174 = vmul.f32 %v154, %v164
  %v175 = vmul.f32 %v155, %v164
  %v176 = vmul.f32 %v156, %v164
  %v177 = vmul.f32 %v157, %v164
  %v178 = vmul.f32 %v158, %v164
  %v179 = vmul.f32 %v159, %v164
  %v180 = vmul.f32 %v160, %v164
  %v181 = vmul.f32 %v161, %v164
  %v182 = vsel %vm72, %v166, 0.0
  %183 = vadd.xlane.f32.xlu0 %v182
  %v184 = vpop.xlane.xlu0 %183
  %v185 = vsel %vm72, %v167, 0.0
  %186 = vadd.xlane.f32.xlu0 %v185
  %v187 = vpop.xlane.xlu0 %186
  %v188 = vsel %vm72, %v168, 0.0
  %189 = vadd.xlane.f32.xlu0 %v188
  %v190 = vpop.xlane.xlu0 %189
  %v191 = vsel %vm72, %v169, 0.0
  %192 = vadd.xlane.f32.xlu0 %v191
  %v193 = vpop.xlane.xlu0 %192
  %v194 = vsel %vm72, %v170, 0.0
  %195 = vadd.xlane.f32.xlu0 %v194
  %v196 = vpop.xlane.xlu0 %195
  %v197 = vsel %vm72, %v171, 0.0
  %198 = vadd.xlane.f32.xlu0 %v197
  %v199 = vpop.xlane.xlu0 %198
  %v200 = vsel %vm72, %v172, 0.0
  %201 = vadd.xlane.f32.xlu0 %v200
  %v202 = vpop.xlane.xlu0 %201
  %v203 = vsel %vm72, %v173, 0.0
  %204 = vadd.xlane.f32.xlu0 %v203
  %v205 = vpop.xlane.xlu0 %204
  %v206 = vsel %vm72, %v174, 0.0
  %207 = vadd.xlane.f32.xlu0 %v206
  %v208 = vpop.xlane.xlu0 %207
  %v209 = vsel %vm72, %v175, 0.0
  %210 = vadd.xlane.f32.xlu0 %v209
  %v211 = vpop.xlane.xlu0 %210
  %v212 = vsel %vm72, %v176, 0.0
  %213 = vadd.xlane.f32.xlu0 %v212
  %v214 = vpop.xlane.xlu0 %213
  %v215 = vsel %vm72, %v177, 0.0
  %216 = vadd.xlane.f32.xlu0 %v215
  %v217 = vpop.xlane.xlu0 %216
  %v218 = vsel %vm72, %v178, 0.0
  %219 = vadd.xlane.f32.xlu0 %v218
  %v220 = vpop.xlane.xlu0 %219
  %v221 = vsel %vm72, %v179, 0.0
  %222 = vadd.xlane.f32.xlu0 %v221
  %v223 = vpop.xlane.xlu0 %222
  %v224 = vsel %vm72, %v180, 0.0
  %225 = vadd.xlane.f32.xlu0 %v224
  %v226 = vpop.xlane.xlu0 %225
  %v227 = vsel %vm72, %v181, 0.0
  %228 = vadd.xlane.f32.xlu0 %v227
  %v229 = vpop.xlane.xlu0 %228
  %v230 = vld [vmem:[#allocation2] sm:$0x1]
  %232 = vset.pattern.permute.xlu0 0
  %233 = vperm.xlu0 %232, %v230
  %v234 = vpop.permute.xlu0 %233
  %v236 = vperm.slane %v234, 0
  %v237 = vadd.f32 %v184, %v236
  %v238 = vadd.f32 %v187, %v236
  %v239 = vadd.f32 %v190, %v236
  %v240 = vadd.f32 %v193, %v236
  %v241 = vadd.f32 %v196, %v236
  %v242 = vadd.f32 %v199, %v236
  %v243 = vadd.f32 %v202, %v236
  %v244 = vadd.f32 %v205, %v236
  %v245 = vadd.f32 %v208, %v236
  %v246 = vadd.f32 %v211, %v236
  %v247 = vadd.f32 %v214, %v236
  %v248 = vadd.f32 %v217, %v236
  %v249 = vadd.f32 %v220, %v236
  %v250 = vadd.f32 %v223, %v236
  %v251 = vadd.f32 %v226, %v236
  %v252 = vadd.f32 %v229, %v236
  %v269 = vlaneseq
  %v270 = vand.u32 %v269, 127
  %v271 = vperm.slane %v237, %v270
  %v272 = vadd.s32 %v270, 4294967288
  %v273 = vperm.slane %v238, %v272
  %vm274 = vcmask 130112
  %v275 = vsel %vm274, %v273, %v271
  %v276 = vadd.s32 %v270, 4294967280
  %v277 = vperm.slane %v239, %v276
  %vm278 = vcmask 195712
  %v279 = vsel %vm278, %v277, %v275
  %v280 = vadd.s32 %v270, 4294967272
  %v281 = vperm.slane %v240, %v280
  %vm282 = vcmask 261312
  %v283 = vsel %vm282, %v281, %v279
  %v284 = vadd.s32 %v270, 4294967264
  %v285 = vperm.slane %v241, %v284
  %vm286 = vcmask 326912
  %v287 = vsel %vm286, %v285, %v283
  %v288 = vadd.s32 %v270, 4294967256
  %v289 = vperm.slane %v242, %v288
  %vm290 = vcmask 392512
  %v291 = vsel %vm290, %v289, %v287
  %v292 = vadd.s32 %v270, 4294967248
  %v293 = vperm.slane %v243, %v292
  %vm294 = vcmask 458112
  %v295 = vsel %vm294, %v293, %v291
  %v296 = vadd.s32 %v270, 4294967240
  %v297 = vperm.slane %v244, %v296
  %vm298 = vcmask 523712
  %v299 = vsel %vm298, %v297, %v295
  %v300 = vadd.s32 %v270, 4294967232
  %v301 = vperm.slane %v245, %v300
  %vm302 = vcmask 589312
  %v303 = vsel %vm302, %v301, %v299
  %v304 = vadd.s32 %v270, 4294967224
  %v305 = vperm.slane %v246, %v304
  %vm306 = vcmask 654912
  %v307 = vsel %vm306, %v305, %v303
  %v308 = vadd.s32 %v270, 4294967216
  %v309 = vperm.slane %v247, %v308
  %vm310 = vcmask 720512
  %v311 = vsel %vm310, %v309, %v307
  %v312 = vadd.s32 %v270, 4294967208
  %v313 = vperm.slane %v248, %v312
  %vm314 = vcmask 786112
  %v315 = vsel %vm314, %v313, %v311
  %v316 = vadd.s32 %v270, 4294967200
  %v317 = vperm.slane %v249, %v316
  %vm318 = vcmask 851712
  %v319 = vsel %vm318, %v317, %v315
  %v320 = vadd.s32 %v270, 4294967192
  %v321 = vperm.slane %v250, %v320
  %vm322 = vcmask 917312
  %v323 = vsel %vm322, %v321, %v319
  %v324 = vadd.s32 %v270, 4294967184
  %v325 = vperm.slane %v251, %v324
  %vm326 = vcmask 982912
  %v327 = vsel %vm326, %v325, %v323
  %v328 = vadd.s32 %v270, 4294967176
  %v329 = vperm.slane %v252, %v328
  %vm330 = vcmask 1048512
  %v331 = vsel %vm330, %v329, %v327
  %333 = vst [vmem:[%s6] sm:$0x1] %v331
  %v334 = vld [vmem:[%s5] sm:$0x1]
  %v335 = vmin.f32 %v237, 0.0
  %v336 = vmin.f32 %v238, 0.0
  %v337 = vmin.f32 %v239, 0.0
  %v338 = vmin.f32 %v240, 0.0
  %v339 = vmin.f32 %v241, 0.0
  %v340 = vmin.f32 %v242, 0.0
  %v341 = vmin.f32 %v243, 0.0
  %v342 = vmin.f32 %v244, 0.0
  %v343 = vmin.f32 %v245, 0.0
  %v344 = vmin.f32 %v246, 0.0
  %v345 = vmin.f32 %v247, 0.0
  %v346 = vmin.f32 %v248, 0.0
  %v347 = vmin.f32 %v249, 0.0
  %v348 = vmin.f32 %v250, 0.0
  %v349 = vmin.f32 %v251, 0.0
  %v350 = vmin.f32 %v252, 0.0
  %v351 = vand.u32 2147483647, %v237
  %v352 = vand.u32 2147483647, %v238
  %v353 = vand.u32 2147483647, %v239
  %v354 = vand.u32 2147483647, %v240
  %v355 = vand.u32 2147483647, %v241
  %v356 = vand.u32 2147483647, %v242
  %v357 = vand.u32 2147483647, %v243
  %v358 = vand.u32 2147483647, %v244
  %v359 = vand.u32 2147483647, %v245
  %v360 = vand.u32 2147483647, %v246
  %v361 = vand.u32 2147483647, %v247
  %v362 = vand.u32 2147483647, %v248
  %v363 = vand.u32 2147483647, %v249
  %v364 = vand.u32 2147483647, %v250
  %v365 = vand.u32 2147483647, %v251
  %v366 = vand.u32 2147483647, %v252
  %v367 = vsub.f32 0.0, %v351
  %v368 = vsub.f32 0.0, %v352
  %v369 = vsub.f32 0.0, %v353
  %v370 = vsub.f32 0.0, %v354
  %v371 = vsub.f32 0.0, %v355
  %v372 = vsub.f32 0.0, %v356
  %v373 = vsub.f32 0.0, %v357
  %v374 = vsub.f32 0.0, %v358
  %v375 = vsub.f32 0.0, %v359
  %v376 = vsub.f32 0.0, %v360
  %v377 = vsub.f32 0.0, %v361
  %v378 = vsub.f32 0.0, %v362
  %v379 = vsub.f32 0.0, %v363
  %v380 = vsub.f32 0.0, %v364
  %v381 = vsub.f32 0.0, %v365
  %v382 = vsub.f32 0.0, %v366
  %v383 = vmul.f32 %v367, 1.442695
  %v384 = vpow.pop %v383
  %v385 = vmul.f32 %v368, 1.442695
  %v386 = vpow.pop %v385
  %v387 = vmul.f32 %v369, 1.442695
  %v388 = vpow.pop %v387
  %v389 = vmul.f32 %v370, 1.442695
  %v390 = vpow.pop %v389
  %v391 = vmul.f32 %v371, 1.442695
  %v392 = vpow.pop %v391
  %v393 = vmul.f32 %v372, 1.442695
  %v394 = vpow.pop %v393
  %v395 = vmul.f32 %v373, 1.442695
  %v396 = vpow.pop %v395
  %v397 = vmul.f32 %v374, 1.442695
  %v398 = vpow.pop %v397
  %v399 = vmul.f32 %v375, 1.442695
  %v400 = vpow.pop %v399
  %v401 = vmul.f32 %v376, 1.442695
  %v402 = vpow.pop %v401
  %v403 = vmul.f32 %v377, 1.442695
  %v404 = vpow.pop %v403
  %v405 = vmul.f32 %v378, 1.442695
  %v406 = vpow.pop %v405
  %v407 = vmul.f32 %v379, 1.442695
  %v408 = vpow.pop %v407
  %v409 = vmul.f32 %v380, 1.442695
  %v410 = vpow.pop %v409
  %v411 = vmul.f32 %v381, 1.442695
  %v412 = vpow.pop %v411
  %v413 = vmul.f32 %v382, 1.442695
  %v414 = vpow.pop %v413
  %v415 = vadd.f32 %v384, 1.0
  %v416 = vadd.f32 %v386, 1.0
  %v417 = vadd.f32 %v388, 1.0
  %v418 = vadd.f32 %v390, 1.0
  %v419 = vadd.f32 %v392, 1.0
  %v420 = vadd.f32 %v394, 1.0
  %v421 = vadd.f32 %v396, 1.0
  %v422 = vadd.f32 %v398, 1.0
  %v423 = vadd.f32 %v400, 1.0
  %v424 = vadd.f32 %v402, 1.0
  %v425 = vadd.f32 %v404, 1.0
  %v426 = vadd.f32 %v406, 1.0
  %v427 = vadd.f32 %v408, 1.0
  %v428 = vadd.f32 %v410, 1.0
  %v429 = vadd.f32 %v412, 1.0
  %v430 = vadd.f32 %v414, 1.0
  %v431 = vlog2.pop %v415
  %v432 = vmul.f32 %v431, 0.6931472
  %v433 = vlog2.pop %v416
  %v434 = vmul.f32 %v433, 0.6931472
  %v435 = vlog2.pop %v417
  %v436 = vmul.f32 %v435, 0.6931472
  %v437 = vlog2.pop %v418
  %v438 = vmul.f32 %v437, 0.6931472
  %v439 = vlog2.pop %v419
  %v440 = vmul.f32 %v439, 0.6931472
  %v441 = vlog2.pop %v420
  %v442 = vmul.f32 %v441, 0.6931472
  %v443 = vlog2.pop %v421
  %v444 = vmul.f32 %v443, 0.6931472
  %v445 = vlog2.pop %v422
  %v446 = vmul.f32 %v445, 0.6931472
  %v447 = vlog2.pop %v423
  %v448 = vmul.f32 %v447, 0.6931472
  %v449 = vlog2.pop %v424
  %v450 = vmul.f32 %v449, 0.6931472
  %v451 = vlog2.pop %v425
  %v452 = vmul.f32 %v451, 0.6931472
  %v453 = vlog2.pop %v426
  %v454 = vmul.f32 %v453, 0.6931472
  %v455 = vlog2.pop %v427
  %v456 = vmul.f32 %v455, 0.6931472
  %v457 = vlog2.pop %v428
  %v458 = vmul.f32 %v457, 0.6931472
  %v459 = vlog2.pop %v429
  %v460 = vmul.f32 %v459, 0.6931472
  %v461 = vlog2.pop %v430
  %v462 = vmul.f32 %v461, 0.6931472
  %v463 = vsub.f32 %v335, %v432
  %v464 = vsub.f32 %v336, %v434
  %v465 = vsub.f32 %v337, %v436
  %v466 = vsub.f32 %v338, %v438
  %v467 = vsub.f32 %v339, %v440
  %v468 = vsub.f32 %v340, %v442
  %v469 = vsub.f32 %v341, %v444
  %v470 = vsub.f32 %v342, %v446
  %v471 = vsub.f32 %v343, %v448
  %v472 = vsub.f32 %v344, %v450
  %v473 = vsub.f32 %v345, %v452
  %v474 = vsub.f32 %v346, %v454
  %v475 = vsub.f32 %v347, %v456
  %v476 = vsub.f32 %v348, %v458
  %v477 = vsub.f32 %v349, %v460
  %v478 = vsub.f32 %v350, %v462
  %v479 = vmax.f32 %v463, -100.0
  %v480 = vmax.f32 %v464, -100.0
  %v481 = vmax.f32 %v465, -100.0
  %v482 = vmax.f32 %v466, -100.0
  %v483 = vmax.f32 %v467, -100.0
  %v484 = vmax.f32 %v468, -100.0
  %v485 = vmax.f32 %v469, -100.0
  %v486 = vmax.f32 %v470, -100.0
  %v487 = vmax.f32 %v471, -100.0
  %v488 = vmax.f32 %v472, -100.0
  %v489 = vmax.f32 %v473, -100.0
  %v490 = vmax.f32 %v474, -100.0
  %v491 = vmax.f32 %v475, -100.0
  %v492 = vmax.f32 %v476, -100.0
  %v493 = vmax.f32 %v477, -100.0
  %v494 = vmax.f32 %v478, -100.0
  %v495 = vsub.f32 0.0, %v237
  %v496 = vsub.f32 0.0, %v238
  %v497 = vsub.f32 0.0, %v239
  %v498 = vsub.f32 0.0, %v240
  %v499 = vsub.f32 0.0, %v241
  %v500 = vsub.f32 0.0, %v242
  %v501 = vsub.f32 0.0, %v243
  %v502 = vsub.f32 0.0, %v244
  %v503 = vsub.f32 0.0, %v245
  %v504 = vsub.f32 0.0, %v246
  %v505 = vsub.f32 0.0, %v247
  %v506 = vsub.f32 0.0, %v248
  %v507 = vsub.f32 0.0, %v249
  %v508 = vsub.f32 0.0, %v250
  %v509 = vsub.f32 0.0, %v251
  %v510 = vsub.f32 0.0, %v252
  %v511 = vmin.f32 %v495, 0.0
  %v512 = vmin.f32 %v496, 0.0
  %v513 = vmin.f32 %v497, 0.0
  %v514 = vmin.f32 %v498, 0.0
  %v515 = vmin.f32 %v499, 0.0
  %v516 = vmin.f32 %v500, 0.0
  %v517 = vmin.f32 %v501, 0.0
  %v518 = vmin.f32 %v502, 0.0
  %v519 = vmin.f32 %v503, 0.0
  %v520 = vmin.f32 %v504, 0.0
  %v521 = vmin.f32 %v505, 0.0
  %v522 = vmin.f32 %v506, 0.0
  %v523 = vmin.f32 %v507, 0.0
  %v524 = vmin.f32 %v508, 0.0
  %v525 = vmin.f32 %v509, 0.0
  %v526 = vmin.f32 %v510, 0.0
  %v527 = vand.u32 2147483647, %v495
  %v528 = vand.u32 2147483647, %v496
  %v529 = vand.u32 2147483647, %v497
  %v530 = vand.u32 2147483647, %v498
  %v531 = vand.u32 2147483647, %v499
  %v532 = vand.u32 2147483647, %v500
  %v533 = vand.u32 2147483647, %v501
  %v534 = vand.u32 2147483647, %v502
  %v535 = vand.u32 2147483647, %v503
  %v536 = vand.u32 2147483647, %v504
  %v537 = vand.u32 2147483647, %v505
  %v538 = vand.u32 2147483647, %v506
  %v539 = vand.u32 2147483647, %v507
  %v540 = vand.u32 2147483647, %v508
  %v541 = vand.u32 2147483647, %v509
  %v542 = vand.u32 2147483647, %v510
  %v543 = vsub.f32 0.0, %v527
  %v544 = vsub.f32 0.0, %v528
  %v545 = vsub.f32 0.0, %v529
  %v546 = vsub.f32 0.0, %v530
  %v547 = vsub.f32 0.0, %v531
  %v548 = vsub.f32 0.0, %v532
  %v549 = vsub.f32 0.0, %v533
  %v550 = vsub.f32 0.0, %v534
  %v551 = vsub.f32 0.0, %v535
  %v552 = vsub.f32 0.0, %v536
  %v553 = vsub.f32 0.0, %v537
  %v554 = vsub.f32 0.0, %v538
  %v555 = vsub.f32 0.0, %v539
  %v556 = vsub.f32 0.0, %v540
  %v557 = vsub.f32 0.0, %v541
  %v558 = vsub.f32 0.0, %v542
  %v559 = vmul.f32 %v543, 1.442695
  %v560 = vpow.pop %v559
  %v561 = vmul.f32 %v544, 1.442695
  %v562 = vpow.pop %v561
  %v563 = vmul.f32 %v545, 1.442695
  %v564 = vpow.pop %v563
  %v565 = vmul.f32 %v546, 1.442695
  %v566 = vpow.pop %v565
  %v567 = vmul.f32 %v547, 1.442695
  %v568 = vpow.pop %v567
  %v569 = vmul.f32 %v548, 1.442695
  %v570 = vpow.pop %v569
  %v571 = vmul.f32 %v549, 1.442695
  %v572 = vpow.pop %v571
  %v573 = vmul.f32 %v550, 1.442695
  %v574 = vpow.pop %v573
  %v575 = vmul.f32 %v551, 1.442695
  %v576 = vpow.pop %v575
  %v577 = vmul.f32 %v552, 1.442695
  %v578 = vpow.pop %v577
  %v579 = vmul.f32 %v553, 1.442695
  %v580 = vpow.pop %v579
  %v581 = vmul.f32 %v554, 1.442695
  %v582 = vpow.pop %v581
  %v583 = vmul.f32 %v555, 1.442695
  %v584 = vpow.pop %v583
  %v585 = vmul.f32 %v556, 1.442695
  %v586 = vpow.pop %v585
  %v587 = vmul.f32 %v557, 1.442695
  %v588 = vpow.pop %v587
  %v589 = vmul.f32 %v558, 1.442695
  %v590 = vpow.pop %v589
  %v591 = vadd.f32 %v560, 1.0
  %v592 = vadd.f32 %v562, 1.0
  %v593 = vadd.f32 %v564, 1.0
  %v594 = vadd.f32 %v566, 1.0
  %v595 = vadd.f32 %v568, 1.0
  %v596 = vadd.f32 %v570, 1.0
  %v597 = vadd.f32 %v572, 1.0
  %v598 = vadd.f32 %v574, 1.0
  %v599 = vadd.f32 %v576, 1.0
  %v600 = vadd.f32 %v578, 1.0
  %v601 = vadd.f32 %v580, 1.0
  %v602 = vadd.f32 %v582, 1.0
  %v603 = vadd.f32 %v584, 1.0
  %v604 = vadd.f32 %v586, 1.0
  %v605 = vadd.f32 %v588, 1.0
  %v606 = vadd.f32 %v590, 1.0
  %v607 = vlog2.pop %v591
  %v608 = vmul.f32 %v607, 0.6931472
  %v609 = vlog2.pop %v592
  %v610 = vmul.f32 %v609, 0.6931472
  %v611 = vlog2.pop %v593
  %v612 = vmul.f32 %v611, 0.6931472
  %v613 = vlog2.pop %v594
  %v614 = vmul.f32 %v613, 0.6931472
  %v615 = vlog2.pop %v595
  %v616 = vmul.f32 %v615, 0.6931472
  %v617 = vlog2.pop %v596
  %v618 = vmul.f32 %v617, 0.6931472
  %v619 = vlog2.pop %v597
  %v620 = vmul.f32 %v619, 0.6931472
  %v621 = vlog2.pop %v598
  %v622 = vmul.f32 %v621, 0.6931472
  %v623 = vlog2.pop %v599
  %v624 = vmul.f32 %v623, 0.6931472
  %v625 = vlog2.pop %v600
  %v626 = vmul.f32 %v625, 0.6931472
  %v627 = vlog2.pop %v601
  %v628 = vmul.f32 %v627, 0.6931472
  %v629 = vlog2.pop %v602
  %v630 = vmul.f32 %v629, 0.6931472
  %v631 = vlog2.pop %v603
  %v632 = vmul.f32 %v631, 0.6931472
  %v633 = vlog2.pop %v604
  %v634 = vmul.f32 %v633, 0.6931472
  %v635 = vlog2.pop %v605
  %v636 = vmul.f32 %v635, 0.6931472
  %v637 = vlog2.pop %v606
  %v638 = vmul.f32 %v637, 0.6931472
  %v639 = vsub.f32 %v511, %v608
  %v640 = vsub.f32 %v512, %v610
  %v641 = vsub.f32 %v513, %v612
  %v642 = vsub.f32 %v514, %v614
  %v643 = vsub.f32 %v515, %v616
  %v644 = vsub.f32 %v516, %v618
  %v645 = vsub.f32 %v517, %v620
  %v646 = vsub.f32 %v518, %v622
  %v647 = vsub.f32 %v519, %v624
  %v648 = vsub.f32 %v520, %v626
  %v649 = vsub.f32 %v521, %v628
  %v650 = vsub.f32 %v522, %v630
  %v651 = vsub.f32 %v523, %v632
  %v652 = vsub.f32 %v524, %v634
  %v653 = vsub.f32 %v525, %v636
  %v654 = vsub.f32 %v526, %v638
  %v655 = vmax.f32 %v639, -100.0
  %v656 = vmax.f32 %v640, -100.0
  %v657 = vmax.f32 %v641, -100.0
  %v658 = vmax.f32 %v642, -100.0
  %v659 = vmax.f32 %v643, -100.0
  %v660 = vmax.f32 %v644, -100.0
  %v661 = vmax.f32 %v645, -100.0
  %v662 = vmax.f32 %v646, -100.0
  %v663 = vmax.f32 %v647, -100.0
  %v664 = vmax.f32 %v648, -100.0
  %v665 = vmax.f32 %v649, -100.0
  %v666 = vmax.f32 %v650, -100.0
  %v667 = vmax.f32 %v651, -100.0
  %v668 = vmax.f32 %v652, -100.0
  %v669 = vmax.f32 %v653, -100.0
  %v670 = vmax.f32 %v654, -100.0
  %v687 = vperm.slane %v479, 0
  %v688 = vperm.slane %v479, 1
  %v689 = vperm.slane %v479, 2
  %v690 = vperm.slane %v479, 3
  %v691 = vperm.slane %v479, 4
  %v692 = vperm.slane %v479, 5
  %v693 = vperm.slane %v479, 6
  %v694 = vperm.slane %v479, 7
  %v695 = vperm.slane %v480, 0
  %v696 = vperm.slane %v480, 1
  %v697 = vperm.slane %v480, 2
  %v698 = vperm.slane %v480, 3
  %v699 = vperm.slane %v480, 4
  %v700 = vperm.slane %v480, 5
  %v701 = vperm.slane %v480, 6
  %v702 = vperm.slane %v480, 7
  %v703 = vperm.slane %v481, 0
  %v704 = vperm.slane %v481, 1
  %v705 = vperm.slane %v481, 2
  %v706 = vperm.slane %v481, 3
  %v707 = vperm.slane %v481, 4
  %v708 = vperm.slane %v481, 5
  %v709 = vperm.slane %v481, 6
  %v710 = vperm.slane %v481, 7
  %v711 = vperm.slane %v482, 0
  %v712 = vperm.slane %v482, 1
  %v713 = vperm.slane %v482, 2
  %v714 = vperm.slane %v482, 3
  %v715 = vperm.slane %v482, 4
  %v716 = vperm.slane %v482, 5
  %v717 = vperm.slane %v482, 6
  %v718 = vperm.slane %v482, 7
  %v719 = vperm.slane %v483, 0
  %v720 = vperm.slane %v483, 1
  %v721 = vperm.slane %v483, 2
  %v722 = vperm.slane %v483, 3
  %v723 = vperm.slane %v483, 4
  %v724 = vperm.slane %v483, 5
  %v725 = vperm.slane %v483, 6
  %v726 = vperm.slane %v483, 7
  %v727 = vperm.slane %v484, 0
  %v728 = vperm.slane %v484, 1
  %v729 = vperm.slane %v484, 2
  %v730 = vperm.slane %v484, 3
  %v731 = vperm.slane %v484, 4
  %v732 = vperm.slane %v484, 5
  %v733 = vperm.slane %v484, 6
  %v734 = vperm.slane %v484, 7
  %v735 = vperm.slane %v485, 0
  %v736 = vperm.slane %v485, 1
  %v737 = vperm.slane %v485, 2
  %v738 = vperm.slane %v485, 3
  %v739 = vperm.slane %v485, 4
  %v740 = vperm.slane %v485, 5
  %v741 = vperm.slane %v485, 6
  %v742 = vperm.slane %v485, 7
  %v743 = vperm.slane %v486, 0
  %v744 = vperm.slane %v486, 1
  %v745 = vperm.slane %v486, 2
  %v746 = vperm.slane %v486, 3
  %v747 = vperm.slane %v486, 4
  %v748 = vperm.slane %v486, 5
  %v749 = vperm.slane %v486, 6
  %v750 = vperm.slane %v486, 7
  %v751 = vperm.slane %v487, 0
  %v752 = vperm.slane %v487, 1
  %v753 = vperm.slane %v487, 2
  %v754 = vperm.slane %v487, 3
  %v755 = vperm.slane %v487, 4
  %v756 = vperm.slane %v487, 5
  %v757 = vperm.slane %v487, 6
  %v758 = vperm.slane %v487, 7
  %v759 = vperm.slane %v488, 0
  %v760 = vperm.slane %v488, 1
  %v761 = vperm.slane %v488, 2
  %v762 = vperm.slane %v488, 3
  %v763 = vperm.slane %v488, 4
  %v764 = vperm.slane %v488, 5
  %v765 = vperm.slane %v488, 6
  %v766 = vperm.slane %v488, 7
  %v767 = vperm.slane %v489, 0
  %v768 = vperm.slane %v489, 1
  %v769 = vperm.slane %v489, 2
  %v770 = vperm.slane %v489, 3
  %v771 = vperm.slane %v489, 4
  %v772 = vperm.slane %v489, 5
  %v773 = vperm.slane %v489, 6
  %v774 = vperm.slane %v489, 7
  %v775 = vperm.slane %v490, 0
  %v776 = vperm.slane %v490, 1
  %v777 = vperm.slane %v490, 2
  %v778 = vperm.slane %v490, 3
  %v779 = vperm.slane %v490, 4
  %v780 = vperm.slane %v490, 5
  %v781 = vperm.slane %v490, 6
  %v782 = vperm.slane %v490, 7
  %v783 = vperm.slane %v491, 0
  %v784 = vperm.slane %v491, 1
  %v785 = vperm.slane %v491, 2
  %v786 = vperm.slane %v491, 3
  %v787 = vperm.slane %v491, 4
  %v788 = vperm.slane %v491, 5
  %v789 = vperm.slane %v491, 6
  %v790 = vperm.slane %v491, 7
  %v791 = vperm.slane %v492, 0
  %v792 = vperm.slane %v492, 1
  %v793 = vperm.slane %v492, 2
  %v794 = vperm.slane %v492, 3
  %v795 = vperm.slane %v492, 4
  %v796 = vperm.slane %v492, 5
  %v797 = vperm.slane %v492, 6
  %v798 = vperm.slane %v492, 7
  %v799 = vperm.slane %v493, 0
  %v800 = vperm.slane %v493, 1
  %v801 = vperm.slane %v493, 2
  %v802 = vperm.slane %v493, 3
  %v803 = vperm.slane %v493, 4
  %v804 = vperm.slane %v493, 5
  %v805 = vperm.slane %v493, 6
  %v806 = vperm.slane %v493, 7
  %v807 = vperm.slane %v494, 0
  %v808 = vperm.slane %v494, 1
  %v809 = vperm.slane %v494, 2
  %v810 = vperm.slane %v494, 3
  %v811 = vperm.slane %v494, 4
  %v812 = vperm.slane %v494, 5
  %v813 = vperm.slane %v494, 6
  %v814 = vperm.slane %v494, 7
  %815 = vst [vmem:[#allocation1] ss:$9 sm:$0xff] %v687
  %s816 = scalar_lea.vmem [#allocation1], 1
  %817 = vst [vmem:[%s816] ss:$9 sm:$0xff] %v688
  %s818 = scalar_lea.vmem [#allocation1], 2
  %819 = vst [vmem:[%s818] ss:$9 sm:$0xff] %v689
  %s820 = scalar_lea.vmem [#allocation1], 3
  %821 = vst [vmem:[%s820] ss:$9 sm:$0xff] %v690
  %s822 = scalar_lea.vmem [#allocation1], 4
  %823 = vst [vmem:[%s822] ss:$9 sm:$0xff] %v691
  %s824 = scalar_lea.vmem [#allocation1], 5
  %825 = vst [vmem:[%s824] ss:$9 sm:$0xff] %v692
  %s826 = scalar_lea.vmem [#allocation1], 6
  %827 = vst [vmem:[%s826] ss:$9 sm:$0xff] %v693
  %s828 = scalar_lea.vmem [#allocation1], 7
  %829 = vst [vmem:[%s828] ss:$9 sm:$0xff] %v694
  %v830 = vld [vmem:[#allocation1] sm:$0xff]
  %831 = vst [vmem:[#allocation1] ss:$9 sm:$0xff] %v695
  %832 = vst [vmem:[%s816] ss:$9 sm:$0xff] %v696
  %833 = vst [vmem:[%s818] ss:$9 sm:$0xff] %v697
  %834 = vst [vmem:[%s820] ss:$9 sm:$0xff] %v698
  %835 = vst [vmem:[%s822] ss:$9 sm:$0xff] %v699
  %836 = vst [vmem:[%s824] ss:$9 sm:$0xff] %v700
  %837 = vst [vmem:[%s826] ss:$9 sm:$0xff] %v701
  %838 = vst [vmem:[%s828] ss:$9 sm:$0xff] %v702
  %v839 = vld [vmem:[#allocation1] sm:$0xff]
  %840 = vst [vmem:[#allocation1] ss:$9 sm:$0xff] %v703
  %841 = vst [vmem:[%s816] ss:$9 sm:$0xff] %v704
  %842 = vst [vmem:[%s818] ss:$9 sm:$0xff] %v705
  %843 = vst [vmem:[%s820] ss:$9 sm:$0xff] %v706
  %844 = vst [vmem:[%s822] ss:$9 sm:$0xff] %v707
  %845 = vst [vmem:[%s824] ss:$9 sm:$0xff] %v708
  %846 = vst [vmem:[%s826] ss:$9 sm:$0xff] %v709
  %847 = vst [vmem:[%s828] ss:$9 sm:$0xff] %v710
  %v848 = vld [vmem:[#allocation1] sm:$0xff]
  %849 = vst [vmem:[#allocation1] ss:$9 sm:$0xff] %v711
  %850 = vst [vmem:[%s816] ss:$9 sm:$0xff] %v712
  %851 = vst [vmem:[%s818] ss:$9 sm:$0xff] %v713
  %852 = vst [vmem:[%s820] ss:$9 sm:$0xff] %v714
  %853 = vst [vmem:[%s822] ss:$9 sm:$0xff] %v715
  %854 = vst [vmem:[%s824] ss:$9 sm:$0xff] %v716
  %855 = vst [vmem:[%s826] ss:$9 sm:$0xff] %v717
  %856 = vst [vmem:[%s828] ss:$9 sm:$0xff] %v718
  %v857 = vld [vmem:[#allocation1] sm:$0xff]
  %858 = vst [vmem:[#allocation1] ss:$9 sm:$0xff] %v719
  %859 = vst [vmem:[%s816] ss:$9 sm:$0xff] %v720
  %860 = vst [vmem:[%s818] ss:$9 sm:$0xff] %v721
  %861 = vst [vmem:[%s820] ss:$9 sm:$0xff] %v722
  %862 = vst [vmem:[%s822] ss:$9 sm:$0xff] %v723
  %863 = vst [vmem:[%s824] ss:$9 sm:$0xff] %v724
  %864 = vst [vmem:[%s826] ss:$9 sm:$0xff] %v725
  %865 = vst [vmem:[%s828] ss:$9 sm:$0xff] %v726
  %v866 = vld [vmem:[#allocation1] sm:$0xff]
  %867 = vst [vmem:[#allocation1] ss:$9 sm:$0xff] %v727
  %868 = vst [vmem:[%s816] ss:$9 sm:$0xff] %v728
  %869 = vst [vmem:[%s818] ss:$9 sm:$0xff] %v729
  %870 = vst [vmem:[%s820] ss:$9 sm:$0xff] %v730
  %871 = vst [vmem:[%s822] ss:$9 sm:$0xff] %v731
  %872 = vst [vmem:[%s824] ss:$9 sm:$0xff] %v732
  %873 = vst [vmem:[%s826] ss:$9 sm:$0xff] %v733
  %874 = vst [vmem:[%s828] ss:$9 sm:$0xff] %v734
  %v875 = vld [vmem:[#allocation1] sm:$0xff]
  %876 = vst [vmem:[#allocation1] ss:$9 sm:$0xff] %v735
  %877 = vst [vmem:[%s816] ss:$9 sm:$0xff] %v736
  %878 = vst [vmem:[%s818] ss:$9 sm:$0xff] %v737
  %879 = vst [vmem:[%s820] ss:$9 sm:$0xff] %v738
  %880 = vst [vmem:[%s822] ss:$9 sm:$0xff] %v739
  %881 = vst [vmem:[%s824] ss:$9 sm:$0xff] %v740
  %882 = vst [vmem:[%s826] ss:$9 sm:$0xff] %v741
  %883 = vst [vmem:[%s828] ss:$9 sm:$0xff] %v742
  %v884 = vld [vmem:[#allocation1] sm:$0xff]
  %885 = vst [vmem:[#allocation1] ss:$9 sm:$0xff] %v743
  %886 = vst [vmem:[%s816] ss:$9 sm:$0xff] %v744
  %887 = vst [vmem:[%s818] ss:$9 sm:$0xff] %v745
  %888 = vst [vmem:[%s820] ss:$9 sm:$0xff] %v746
  %889 = vst [vmem:[%s822] ss:$9 sm:$0xff] %v747
  %890 = vst [vmem:[%s824] ss:$9 sm:$0xff] %v748
  %891 = vst [vmem:[%s826] ss:$9 sm:$0xff] %v749
  %892 = vst [vmem:[%s828] ss:$9 sm:$0xff] %v750
  %v893 = vld [vmem:[#allocation1] sm:$0xff]
  %894 = vst [vmem:[#allocation1] ss:$9 sm:$0xff] %v751
  %895 = vst [vmem:[%s816] ss:$9 sm:$0xff] %v752
  %896 = vst [vmem:[%s818] ss:$9 sm:$0xff] %v753
  %897 = vst [vmem:[%s820] ss:$9 sm:$0xff] %v754
  %898 = vst [vmem:[%s822] ss:$9 sm:$0xff] %v755
  %899 = vst [vmem:[%s824] ss:$9 sm:$0xff] %v756
  %900 = vst [vmem:[%s826] ss:$9 sm:$0xff] %v757
  %901 = vst [vmem:[%s828] ss:$9 sm:$0xff] %v758
  %v902 = vld [vmem:[#allocation1] sm:$0xff]
  %903 = vst [vmem:[#allocation1] ss:$9 sm:$0xff] %v759
  %904 = vst [vmem:[%s816] ss:$9 sm:$0xff] %v760
  %905 = vst [vmem:[%s818] ss:$9 sm:$0xff] %v761
  %906 = vst [vmem:[%s820] ss:$9 sm:$0xff] %v762
  %907 = vst [vmem:[%s822] ss:$9 sm:$0xff] %v763
  %908 = vst [vmem:[%s824] ss:$9 sm:$0xff] %v764
  %909 = vst [vmem:[%s826] ss:$9 sm:$0xff] %v765
  %910 = vst [vmem:[%s828] ss:$9 sm:$0xff] %v766
  %v911 = vld [vmem:[#allocation1] sm:$0xff]
  %912 = vst [vmem:[#allocation1] ss:$9 sm:$0xff] %v767
  %913 = vst [vmem:[%s816] ss:$9 sm:$0xff] %v768
  %914 = vst [vmem:[%s818] ss:$9 sm:$0xff] %v769
  %915 = vst [vmem:[%s820] ss:$9 sm:$0xff] %v770
  %916 = vst [vmem:[%s822] ss:$9 sm:$0xff] %v771
  %917 = vst [vmem:[%s824] ss:$9 sm:$0xff] %v772
  %918 = vst [vmem:[%s826] ss:$9 sm:$0xff] %v773
  %919 = vst [vmem:[%s828] ss:$9 sm:$0xff] %v774
  %v920 = vld [vmem:[#allocation1] sm:$0xff]
  %921 = vst [vmem:[#allocation1] ss:$9 sm:$0xff] %v775
  %922 = vst [vmem:[%s816] ss:$9 sm:$0xff] %v776
  %923 = vst [vmem:[%s818] ss:$9 sm:$0xff] %v777
  %924 = vst [vmem:[%s820] ss:$9 sm:$0xff] %v778
  %925 = vst [vmem:[%s822] ss:$9 sm:$0xff] %v779
  %926 = vst [vmem:[%s824] ss:$9 sm:$0xff] %v780
  %927 = vst [vmem:[%s826] ss:$9 sm:$0xff] %v781
  %928 = vst [vmem:[%s828] ss:$9 sm:$0xff] %v782
  %v929 = vld [vmem:[#allocation1] sm:$0xff]
  %930 = vst [vmem:[#allocation1] ss:$9 sm:$0xff] %v783
  %931 = vst [vmem:[%s816] ss:$9 sm:$0xff] %v784
  %932 = vst [vmem:[%s818] ss:$9 sm:$0xff] %v785
  %933 = vst [vmem:[%s820] ss:$9 sm:$0xff] %v786
  %934 = vst [vmem:[%s822] ss:$9 sm:$0xff] %v787
  %935 = vst [vmem:[%s824] ss:$9 sm:$0xff] %v788
  %936 = vst [vmem:[%s826] ss:$9 sm:$0xff] %v789
  %937 = vst [vmem:[%s828] ss:$9 sm:$0xff] %v790
  %v938 = vld [vmem:[#allocation1] sm:$0xff]
  %939 = vst [vmem:[#allocation1] ss:$9 sm:$0xff] %v791
  %940 = vst [vmem:[%s816] ss:$9 sm:$0xff] %v792
  %941 = vst [vmem:[%s818] ss:$9 sm:$0xff] %v793
  %942 = vst [vmem:[%s820] ss:$9 sm:$0xff] %v794
  %943 = vst [vmem:[%s822] ss:$9 sm:$0xff] %v795
  %944 = vst [vmem:[%s824] ss:$9 sm:$0xff] %v796
  %945 = vst [vmem:[%s826] ss:$9 sm:$0xff] %v797
  %946 = vst [vmem:[%s828] ss:$9 sm:$0xff] %v798
  %v947 = vld [vmem:[#allocation1] sm:$0xff]
  %948 = vst [vmem:[#allocation1] ss:$9 sm:$0xff] %v799
  %949 = vst [vmem:[%s816] ss:$9 sm:$0xff] %v800
  %950 = vst [vmem:[%s818] ss:$9 sm:$0xff] %v801
  %951 = vst [vmem:[%s820] ss:$9 sm:$0xff] %v802
  %952 = vst [vmem:[%s822] ss:$9 sm:$0xff] %v803
  %953 = vst [vmem:[%s824] ss:$9 sm:$0xff] %v804
  %954 = vst [vmem:[%s826] ss:$9 sm:$0xff] %v805
  %955 = vst [vmem:[%s828] ss:$9 sm:$0xff] %v806
  %v956 = vld [vmem:[#allocation1] sm:$0xff]
  %957 = vst [vmem:[#allocation1] ss:$9 sm:$0xff] %v807
  %958 = vst [vmem:[%s816] ss:$9 sm:$0xff] %v808
  %959 = vst [vmem:[%s818] ss:$9 sm:$0xff] %v809
  %960 = vst [vmem:[%s820] ss:$9 sm:$0xff] %v810
  %961 = vst [vmem:[%s822] ss:$9 sm:$0xff] %v811
  %962 = vst [vmem:[%s824] ss:$9 sm:$0xff] %v812
  %963 = vst [vmem:[%s826] ss:$9 sm:$0xff] %v813
  %964 = vst [vmem:[%s828] ss:$9 sm:$0xff] %v814
  %v965 = vld [vmem:[#allocation1] sm:$0xff]
  %966 = vset.pattern.permute.xlu0 0
  %967 = vperm.xlu0 %966, %v830
  %v968 = vpop.permute.xlu0 %967
  %969 = vset.pattern.permute.xlu0 0
  %970 = vperm.xlu0 %969, %v839
  %v971 = vpop.permute.xlu0 %970
  %972 = vset.pattern.permute.xlu0 0
  %973 = vperm.xlu0 %972, %v848
  %v974 = vpop.permute.xlu0 %973
  %975 = vset.pattern.permute.xlu0 0
  %976 = vperm.xlu0 %975, %v857
  %v977 = vpop.permute.xlu0 %976
  %978 = vset.pattern.permute.xlu0 0
  %979 = vperm.xlu0 %978, %v866
  %v980 = vpop.permute.xlu0 %979
  %981 = vset.pattern.permute.xlu0 0
  %982 = vperm.xlu0 %981, %v875
  %v983 = vpop.permute.xlu0 %982
  %984 = vset.pattern.permute.xlu0 0
  %985 = vperm.xlu0 %984, %v884
  %v986 = vpop.permute.xlu0 %985
  %987 = vset.pattern.permute.xlu0 0
  %988 = vperm.xlu0 %987, %v893
  %v989 = vpop.permute.xlu0 %988
  %990 = vset.pattern.permute.xlu0 0
  %991 = vperm.xlu0 %990, %v902
  %v992 = vpop.permute.xlu0 %991
  %993 = vset.pattern.permute.xlu0 0
  %994 = vperm.xlu0 %993, %v911
  %v995 = vpop.permute.xlu0 %994
  %996 = vset.pattern.permute.xlu0 0
  %997 = vperm.xlu0 %996, %v920
  %v998 = vpop.permute.xlu0 %997
  %999 = vset.pattern.permute.xlu0 0
  %1000 = vperm.xlu0 %999, %v929
  %v1001 = vpop.permute.xlu0 %1000
  %1002 = vset.pattern.permute.xlu0 0
  %1003 = vperm.xlu0 %1002, %v938
  %v1004 = vpop.permute.xlu0 %1003
  %1005 = vset.pattern.permute.xlu0 0
  %1006 = vperm.xlu0 %1005, %v947
  %v1007 = vpop.permute.xlu0 %1006
  %1008 = vset.pattern.permute.xlu0 0
  %1009 = vperm.xlu0 %1008, %v956
  %v1010 = vpop.permute.xlu0 %1009
  %1011 = vset.pattern.permute.xlu0 0
  %1012 = vperm.xlu0 %1011, %v965
  %v1013 = vpop.permute.xlu0 %1012
  %v1014 = vperm.slane %v968, %v270
  %v1015 = vperm.slane %v971, %v272
  %v1016 = vsel %vm274, %v1015, %v1014
  %v1017 = vperm.slane %v974, %v276
  %v1018 = vsel %vm278, %v1017, %v1016
  %v1019 = vperm.slane %v977, %v280
  %v1020 = vsel %vm282, %v1019, %v1018
  %v1021 = vperm.slane %v980, %v284
  %v1022 = vsel %vm286, %v1021, %v1020
  %v1023 = vperm.slane %v983, %v288
  %v1024 = vsel %vm290, %v1023, %v1022
  %v1025 = vperm.slane %v986, %v292
  %v1026 = vsel %vm294, %v1025, %v1024
  %v1027 = vperm.slane %v989, %v296
  %v1028 = vsel %vm298, %v1027, %v1026
  %v1029 = vperm.slane %v992, %v300
  %v1030 = vsel %vm302, %v1029, %v1028
  %v1031 = vperm.slane %v995, %v304
  %v1032 = vsel %vm306, %v1031, %v1030
  %v1033 = vperm.slane %v998, %v308
  %v1034 = vsel %vm310, %v1033, %v1032
  %v1035 = vperm.slane %v1001, %v312
  %v1036 = vsel %vm314, %v1035, %v1034
  %v1037 = vperm.slane %v1004, %v316
  %v1038 = vsel %vm318, %v1037, %v1036
  %v1039 = vperm.slane %v1007, %v320
  %v1040 = vsel %vm322, %v1039, %v1038
  %v1041 = vperm.slane %v1010, %v324
  %v1042 = vsel %vm326, %v1041, %v1040
  %v1043 = vperm.slane %v1013, %v328
  %v1044 = vsel %vm330, %v1043, %v1042
  %v1046 = vmul.f32 %v334, %v1044
  %v1047 = vsub.f32 1.0, %v334
  %v1064 = vperm.slane %v655, 0
  %v1065 = vperm.slane %v655, 1
  %v1066 = vperm.slane %v655, 2
  %v1067 = vperm.slane %v655, 3
  %v1068 = vperm.slane %v655, 4
  %v1069 = vperm.slane %v655, 5
  %v1070 = vperm.slane %v655, 6
  %v1071 = vperm.slane %v655, 7
  %v1072 = vperm.slane %v656, 0
  %v1073 = vperm.slane %v656, 1
  %v1074 = vperm.slane %v656, 2
  %v1075 = vperm.slane %v656, 3
  %v1076 = vperm.slane %v656, 4
  %v1077 = vperm.slane %v656, 5
  %v1078 = vperm.slane %v656, 6
  %v1079 = vperm.slane %v656, 7
  %v1080 = vperm.slane %v657, 0
  %v1081 = vperm.slane %v657, 1
  %v1082 = vperm.slane %v657, 2
  %v1083 = vperm.slane %v657, 3
  %v1084 = vperm.slane %v657, 4
  %v1085 = vperm.slane %v657, 5
  %v1086 = vperm.slane %v657, 6
  %v1087 = vperm.slane %v657, 7
  %v1088 = vperm.slane %v658, 0
  %v1089 = vperm.slane %v658, 1
  %v1090 = vperm.slane %v658, 2
  %v1091 = vperm.slane %v658, 3
  %v1092 = vperm.slane %v658, 4
  %v1093 = vperm.slane %v658, 5
  %v1094 = vperm.slane %v658, 6
  %v1095 = vperm.slane %v658, 7
  %v1096 = vperm.slane %v659, 0
  %v1097 = vperm.slane %v659, 1
  %v1098 = vperm.slane %v659, 2
  %v1099 = vperm.slane %v659, 3
  %v1100 = vperm.slane %v659, 4
  %v1101 = vperm.slane %v659, 5
  %v1102 = vperm.slane %v659, 6
  %v1103 = vperm.slane %v659, 7
  %v1104 = vperm.slane %v660, 0
  %v1105 = vperm.slane %v660, 1
  %v1106 = vperm.slane %v660, 2
  %v1107 = vperm.slane %v660, 3
  %v1108 = vperm.slane %v660, 4
  %v1109 = vperm.slane %v660, 5
  %v1110 = vperm.slane %v660, 6
  %v1111 = vperm.slane %v660, 7
  %v1112 = vperm.slane %v661, 0
  %v1113 = vperm.slane %v661, 1
  %v1114 = vperm.slane %v661, 2
  %v1115 = vperm.slane %v661, 3
  %v1116 = vperm.slane %v661, 4
  %v1117 = vperm.slane %v661, 5
  %v1118 = vperm.slane %v661, 6
  %v1119 = vperm.slane %v661, 7
  %v1120 = vperm.slane %v662, 0
  %v1121 = vperm.slane %v662, 1
  %v1122 = vperm.slane %v662, 2
  %v1123 = vperm.slane %v662, 3
  %v1124 = vperm.slane %v662, 4
  %v1125 = vperm.slane %v662, 5
  %v1126 = vperm.slane %v662, 6
  %v1127 = vperm.slane %v662, 7
  %v1128 = vperm.slane %v663, 0
  %v1129 = vperm.slane %v663, 1
  %v1130 = vperm.slane %v663, 2
  %v1131 = vperm.slane %v663, 3
  %v1132 = vperm.slane %v663, 4
  %v1133 = vperm.slane %v663, 5
  %v1134 = vperm.slane %v663, 6
  %v1135 = vperm.slane %v663, 7
  %v1136 = vperm.slane %v664, 0
  %v1137 = vperm.slane %v664, 1
  %v1138 = vperm.slane %v664, 2
  %v1139 = vperm.slane %v664, 3
  %v1140 = vperm.slane %v664, 4
  %v1141 = vperm.slane %v664, 5
  %v1142 = vperm.slane %v664, 6
  %v1143 = vperm.slane %v664, 7
  %v1144 = vperm.slane %v665, 0
  %v1145 = vperm.slane %v665, 1
  %v1146 = vperm.slane %v665, 2
  %v1147 = vperm.slane %v665, 3
  %v1148 = vperm.slane %v665, 4
  %v1149 = vperm.slane %v665, 5
  %v1150 = vperm.slane %v665, 6
  %v1151 = vperm.slane %v665, 7
  %v1152 = vperm.slane %v666, 0
  %v1153 = vperm.slane %v666, 1
  %v1154 = vperm.slane %v666, 2
  %v1155 = vperm.slane %v666, 3
  %v1156 = vperm.slane %v666, 4
  %v1157 = vperm.slane %v666, 5
  %v1158 = vperm.slane %v666, 6
  %v1159 = vperm.slane %v666, 7
  %v1160 = vperm.slane %v667, 0
  %v1161 = vperm.slane %v667, 1
  %v1162 = vperm.slane %v667, 2
  %v1163 = vperm.slane %v667, 3
  %v1164 = vperm.slane %v667, 4
  %v1165 = vperm.slane %v667, 5
  %v1166 = vperm.slane %v667, 6
  %v1167 = vperm.slane %v667, 7
  %v1168 = vperm.slane %v668, 0
  %v1169 = vperm.slane %v668, 1
  %v1170 = vperm.slane %v668, 2
  %v1171 = vperm.slane %v668, 3
  %v1172 = vperm.slane %v668, 4
  %v1173 = vperm.slane %v668, 5
  %v1174 = vperm.slane %v668, 6
  %v1175 = vperm.slane %v668, 7
  %v1176 = vperm.slane %v669, 0
  %v1177 = vperm.slane %v669, 1
  %v1178 = vperm.slane %v669, 2
  %v1179 = vperm.slane %v669, 3
  %v1180 = vperm.slane %v669, 4
  %v1181 = vperm.slane %v669, 5
  %v1182 = vperm.slane %v669, 6
  %v1183 = vperm.slane %v669, 7
  %v1184 = vperm.slane %v670, 0
  %v1185 = vperm.slane %v670, 1
  %v1186 = vperm.slane %v670, 2
  %v1187 = vperm.slane %v670, 3
  %v1188 = vperm.slane %v670, 4
  %v1189 = vperm.slane %v670, 5
  %v1190 = vperm.slane %v670, 6
  %v1191 = vperm.slane %v670, 7
  %1192 = vst [vmem:[#allocation1] ss:$9 sm:$0xff] %v1064
  %s1193 = scalar_lea.vmem [#allocation1], 1
  %1194 = vst [vmem:[%s1193] ss:$9 sm:$0xff] %v1065
  %s1195 = scalar_lea.vmem [#allocation1], 2
  %1196 = vst [vmem:[%s1195] ss:$9 sm:$0xff] %v1066
  %s1197 = scalar_lea.vmem [#allocation1], 3
  %1198 = vst [vmem:[%s1197] ss:$9 sm:$0xff] %v1067
  %s1199 = scalar_lea.vmem [#allocation1], 4
  %1200 = vst [vmem:[%s1199] ss:$9 sm:$0xff] %v1068
  %s1201 = scalar_lea.vmem [#allocation1], 5
  %1202 = vst [vmem:[%s1201] ss:$9 sm:$0xff] %v1069
  %s1203 = scalar_lea.vmem [#allocation1], 6
  %1204 = vst [vmem:[%s1203] ss:$9 sm:$0xff] %v1070
  %s1205 = scalar_lea.vmem [#allocation1], 7
  %1206 = vst [vmem:[%s1205] ss:$9 sm:$0xff] %v1071
  %v1207 = vld [vmem:[#allocation1] sm:$0xff]
  %1208 = vst [vmem:[#allocation1] ss:$9 sm:$0xff] %v1072
  %1209 = vst [vmem:[%s1193] ss:$9 sm:$0xff] %v1073
  %1210 = vst [vmem:[%s1195] ss:$9 sm:$0xff] %v1074
  %1211 = vst [vmem:[%s1197] ss:$9 sm:$0xff] %v1075
  %1212 = vst [vmem:[%s1199] ss:$9 sm:$0xff] %v1076
  %1213 = vst [vmem:[%s1201] ss:$9 sm:$0xff] %v1077
  %1214 = vst [vmem:[%s1203] ss:$9 sm:$0xff] %v1078
  %1215 = vst [vmem:[%s1205] ss:$9 sm:$0xff] %v1079
  %v1216 = vld [vmem:[#allocation1] sm:$0xff]
  %1217 = vst [vmem:[#allocation1] ss:$9 sm:$0xff] %v1080
  %1218 = vst [vmem:[%s1193] ss:$9 sm:$0xff] %v1081
  %1219 = vst [vmem:[%s1195] ss:$9 sm:$0xff] %v1082
  %1220 = vst [vmem:[%s1197] ss:$9 sm:$0xff] %v1083
  %1221 = vst [vmem:[%s1199] ss:$9 sm:$0xff] %v1084
  %1222 = vst [vmem:[%s1201] ss:$9 sm:$0xff] %v1085
  %1223 = vst [vmem:[%s1203] ss:$9 sm:$0xff] %v1086
  %1224 = vst [vmem:[%s1205] ss:$9 sm:$0xff] %v1087
  %v1225 = vld [vmem:[#allocation1] sm:$0xff]
  %1226 = vst [vmem:[#allocation1] ss:$9 sm:$0xff] %v1088
  %1227 = vst [vmem:[%s1193] ss:$9 sm:$0xff] %v1089
  %1228 = vst [vmem:[%s1195] ss:$9 sm:$0xff] %v1090
  %1229 = vst [vmem:[%s1197] ss:$9 sm:$0xff] %v1091
  %1230 = vst [vmem:[%s1199] ss:$9 sm:$0xff] %v1092
  %1231 = vst [vmem:[%s1201] ss:$9 sm:$0xff] %v1093
  %1232 = vst [vmem:[%s1203] ss:$9 sm:$0xff] %v1094
  %1233 = vst [vmem:[%s1205] ss:$9 sm:$0xff] %v1095
  %v1234 = vld [vmem:[#allocation1] sm:$0xff]
  %1235 = vst [vmem:[#allocation1] ss:$9 sm:$0xff] %v1096
  %1236 = vst [vmem:[%s1193] ss:$9 sm:$0xff] %v1097
  %1237 = vst [vmem:[%s1195] ss:$9 sm:$0xff] %v1098
  %1238 = vst [vmem:[%s1197] ss:$9 sm:$0xff] %v1099
  %1239 = vst [vmem:[%s1199] ss:$9 sm:$0xff] %v1100
  %1240 = vst [vmem:[%s1201] ss:$9 sm:$0xff] %v1101
  %1241 = vst [vmem:[%s1203] ss:$9 sm:$0xff] %v1102
  %1242 = vst [vmem:[%s1205] ss:$9 sm:$0xff] %v1103
  %v1243 = vld [vmem:[#allocation1] sm:$0xff]
  %1244 = vst [vmem:[#allocation1] ss:$9 sm:$0xff] %v1104
  %1245 = vst [vmem:[%s1193] ss:$9 sm:$0xff] %v1105
  %1246 = vst [vmem:[%s1195] ss:$9 sm:$0xff] %v1106
  %1247 = vst [vmem:[%s1197] ss:$9 sm:$0xff] %v1107
  %1248 = vst [vmem:[%s1199] ss:$9 sm:$0xff] %v1108
  %1249 = vst [vmem:[%s1201] ss:$9 sm:$0xff] %v1109
  %1250 = vst [vmem:[%s1203] ss:$9 sm:$0xff] %v1110
  %1251 = vst [vmem:[%s1205] ss:$9 sm:$0xff] %v1111
  %v1252 = vld [vmem:[#allocation1] sm:$0xff]
  %1253 = vst [vmem:[#allocation1] ss:$9 sm:$0xff] %v1112
  %1254 = vst [vmem:[%s1193] ss:$9 sm:$0xff] %v1113
  %1255 = vst [vmem:[%s1195] ss:$9 sm:$0xff] %v1114
  %1256 = vst [vmem:[%s1197] ss:$9 sm:$0xff] %v1115
  %1257 = vst [vmem:[%s1199] ss:$9 sm:$0xff] %v1116
  %1258 = vst [vmem:[%s1201] ss:$9 sm:$0xff] %v1117
  %1259 = vst [vmem:[%s1203] ss:$9 sm:$0xff] %v1118
  %1260 = vst [vmem:[%s1205] ss:$9 sm:$0xff] %v1119
  %v1261 = vld [vmem:[#allocation1] sm:$0xff]
  %1262 = vst [vmem:[#allocation1] ss:$9 sm:$0xff] %v1120
  %1263 = vst [vmem:[%s1193] ss:$9 sm:$0xff] %v1121
  %1264 = vst [vmem:[%s1195] ss:$9 sm:$0xff] %v1122
  %1265 = vst [vmem:[%s1197] ss:$9 sm:$0xff] %v1123
  %1266 = vst [vmem:[%s1199] ss:$9 sm:$0xff] %v1124
  %1267 = vst [vmem:[%s1201] ss:$9 sm:$0xff] %v1125
  %1268 = vst [vmem:[%s1203] ss:$9 sm:$0xff] %v1126
  %1269 = vst [vmem:[%s1205] ss:$9 sm:$0xff] %v1127
  %v1270 = vld [vmem:[#allocation1] sm:$0xff]
  %1271 = vst [vmem:[#allocation1] ss:$9 sm:$0xff] %v1128
  %1272 = vst [vmem:[%s1193] ss:$9 sm:$0xff] %v1129
  %1273 = vst [vmem:[%s1195] ss:$9 sm:$0xff] %v1130
  %1274 = vst [vmem:[%s1197] ss:$9 sm:$0xff] %v1131
  %1275 = vst [vmem:[%s1199] ss:$9 sm:$0xff] %v1132
  %1276 = vst [vmem:[%s1201] ss:$9 sm:$0xff] %v1133
  %1277 = vst [vmem:[%s1203] ss:$9 sm:$0xff] %v1134
  %1278 = vst [vmem:[%s1205] ss:$9 sm:$0xff] %v1135
  %v1279 = vld [vmem:[#allocation1] sm:$0xff]
  %1280 = vst [vmem:[#allocation1] ss:$9 sm:$0xff] %v1136
  %1281 = vst [vmem:[%s1193] ss:$9 sm:$0xff] %v1137
  %1282 = vst [vmem:[%s1195] ss:$9 sm:$0xff] %v1138
  %1283 = vst [vmem:[%s1197] ss:$9 sm:$0xff] %v1139
  %1284 = vst [vmem:[%s1199] ss:$9 sm:$0xff] %v1140
  %1285 = vst [vmem:[%s1201] ss:$9 sm:$0xff] %v1141
  %1286 = vst [vmem:[%s1203] ss:$9 sm:$0xff] %v1142
  %1287 = vst [vmem:[%s1205] ss:$9 sm:$0xff] %v1143
  %v1288 = vld [vmem:[#allocation1] sm:$0xff]
  %1289 = vst [vmem:[#allocation1] ss:$9 sm:$0xff] %v1144
  %1290 = vst [vmem:[%s1193] ss:$9 sm:$0xff] %v1145
  %1291 = vst [vmem:[%s1195] ss:$9 sm:$0xff] %v1146
  %1292 = vst [vmem:[%s1197] ss:$9 sm:$0xff] %v1147
  %1293 = vst [vmem:[%s1199] ss:$9 sm:$0xff] %v1148
  %1294 = vst [vmem:[%s1201] ss:$9 sm:$0xff] %v1149
  %1295 = vst [vmem:[%s1203] ss:$9 sm:$0xff] %v1150
  %1296 = vst [vmem:[%s1205] ss:$9 sm:$0xff] %v1151
  %v1297 = vld [vmem:[#allocation1] sm:$0xff]
  %1298 = vst [vmem:[#allocation1] ss:$9 sm:$0xff] %v1152
  %1299 = vst [vmem:[%s1193] ss:$9 sm:$0xff] %v1153
  %1300 = vst [vmem:[%s1195] ss:$9 sm:$0xff] %v1154
  %1301 = vst [vmem:[%s1197] ss:$9 sm:$0xff] %v1155
  %1302 = vst [vmem:[%s1199] ss:$9 sm:$0xff] %v1156
  %1303 = vst [vmem:[%s1201] ss:$9 sm:$0xff] %v1157
  %1304 = vst [vmem:[%s1203] ss:$9 sm:$0xff] %v1158
  %1305 = vst [vmem:[%s1205] ss:$9 sm:$0xff] %v1159
  %v1306 = vld [vmem:[#allocation1] sm:$0xff]
  %1307 = vst [vmem:[#allocation1] ss:$9 sm:$0xff] %v1160
  %1308 = vst [vmem:[%s1193] ss:$9 sm:$0xff] %v1161
  %1309 = vst [vmem:[%s1195] ss:$9 sm:$0xff] %v1162
  %1310 = vst [vmem:[%s1197] ss:$9 sm:$0xff] %v1163
  %1311 = vst [vmem:[%s1199] ss:$9 sm:$0xff] %v1164
  %1312 = vst [vmem:[%s1201] ss:$9 sm:$0xff] %v1165
  %1313 = vst [vmem:[%s1203] ss:$9 sm:$0xff] %v1166
  %1314 = vst [vmem:[%s1205] ss:$9 sm:$0xff] %v1167
  %v1315 = vld [vmem:[#allocation1] sm:$0xff]
  %1316 = vst [vmem:[#allocation1] ss:$9 sm:$0xff] %v1168
  %1317 = vst [vmem:[%s1193] ss:$9 sm:$0xff] %v1169
  %1318 = vst [vmem:[%s1195] ss:$9 sm:$0xff] %v1170
  %1319 = vst [vmem:[%s1197] ss:$9 sm:$0xff] %v1171
  %1320 = vst [vmem:[%s1199] ss:$9 sm:$0xff] %v1172
  %1321 = vst [vmem:[%s1201] ss:$9 sm:$0xff] %v1173
  %1322 = vst [vmem:[%s1203] ss:$9 sm:$0xff] %v1174
  %1323 = vst [vmem:[%s1205] ss:$9 sm:$0xff] %v1175
  %v1324 = vld [vmem:[#allocation1] sm:$0xff]
  %1325 = vst [vmem:[#allocation1] ss:$9 sm:$0xff] %v1176
  %1326 = vst [vmem:[%s1193] ss:$9 sm:$0xff] %v1177
  %1327 = vst [vmem:[%s1195] ss:$9 sm:$0xff] %v1178
  %1328 = vst [vmem:[%s1197] ss:$9 sm:$0xff] %v1179
  %1329 = vst [vmem:[%s1199] ss:$9 sm:$0xff] %v1180
  %1330 = vst [vmem:[%s1201] ss:$9 sm:$0xff] %v1181
  %1331 = vst [vmem:[%s1203] ss:$9 sm:$0xff] %v1182
  %1332 = vst [vmem:[%s1205] ss:$9 sm:$0xff] %v1183
  %v1333 = vld [vmem:[#allocation1] sm:$0xff]
  %1334 = vst [vmem:[#allocation1] ss:$9 sm:$0xff] %v1184
  %1335 = vst [vmem:[%s1193] ss:$9 sm:$0xff] %v1185
  %1336 = vst [vmem:[%s1195] ss:$9 sm:$0xff] %v1186
  %1337 = vst [vmem:[%s1197] ss:$9 sm:$0xff] %v1187
  %1338 = vst [vmem:[%s1199] ss:$9 sm:$0xff] %v1188
  %1339 = vst [vmem:[%s1201] ss:$9 sm:$0xff] %v1189
  %1340 = vst [vmem:[%s1203] ss:$9 sm:$0xff] %v1190
  %1341 = vst [vmem:[%s1205] ss:$9 sm:$0xff] %v1191
  %v1342 = vld [vmem:[#allocation1] sm:$0xff]
  %1343 = vset.pattern.permute.xlu0 0
  %1344 = vperm.xlu0 %1343, %v1207
  %v1345 = vpop.permute.xlu0 %1344
  %1346 = vset.pattern.permute.xlu0 0
  %1347 = vperm.xlu0 %1346, %v1216
  %v1348 = vpop.permute.xlu0 %1347
  %1349 = vset.pattern.permute.xlu0 0
  %1350 = vperm.xlu0 %1349, %v1225
  %v1351 = vpop.permute.xlu0 %1350
  %1352 = vset.pattern.permute.xlu0 0
  %1353 = vperm.xlu0 %1352, %v1234
  %v1354 = vpop.permute.xlu0 %1353
  %1355 = vset.pattern.permute.xlu0 0
  %1356 = vperm.xlu0 %1355, %v1243
  %v1357 = vpop.permute.xlu0 %1356
  %1358 = vset.pattern.permute.xlu0 0
  %1359 = vperm.xlu0 %1358, %v1252
  %v1360 = vpop.permute.xlu0 %1359
  %1361 = vset.pattern.permute.xlu0 0
  %1362 = vperm.xlu0 %1361, %v1261
  %v1363 = vpop.permute.xlu0 %1362
  %1364 = vset.pattern.permute.xlu0 0
  %1365 = vperm.xlu0 %1364, %v1270
  %v1366 = vpop.permute.xlu0 %1365
  %1367 = vset.pattern.permute.xlu0 0
  %1368 = vperm.xlu0 %1367, %v1279
  %v1369 = vpop.permute.xlu0 %1368
  %1370 = vset.pattern.permute.xlu0 0
  %1371 = vperm.xlu0 %1370, %v1288
  %v1372 = vpop.permute.xlu0 %1371
  %1373 = vset.pattern.permute.xlu0 0
  %1374 = vperm.xlu0 %1373, %v1297
  %v1375 = vpop.permute.xlu0 %1374
  %1376 = vset.pattern.permute.xlu0 0
  %1377 = vperm.xlu0 %1376, %v1306
  %v1378 = vpop.permute.xlu0 %1377
  %1379 = vset.pattern.permute.xlu0 0
  %1380 = vperm.xlu0 %1379, %v1315
  %v1381 = vpop.permute.xlu0 %1380
  %1382 = vset.pattern.permute.xlu0 0
  %1383 = vperm.xlu0 %1382, %v1324
  %v1384 = vpop.permute.xlu0 %1383
  %1385 = vset.pattern.permute.xlu0 0
  %1386 = vperm.xlu0 %1385, %v1333
  %v1387 = vpop.permute.xlu0 %1386
  %1388 = vset.pattern.permute.xlu0 0
  %1389 = vperm.xlu0 %1388, %v1342
  %v1390 = vpop.permute.xlu0 %1389
  %v1391 = vperm.slane %v1345, %v270
  %v1392 = vperm.slane %v1348, %v272
  %v1393 = vsel %vm274, %v1392, %v1391
  %v1394 = vperm.slane %v1351, %v276
  %v1395 = vsel %vm278, %v1394, %v1393
  %v1396 = vperm.slane %v1354, %v280
  %v1397 = vsel %vm282, %v1396, %v1395
  %v1398 = vperm.slane %v1357, %v284
  %v1399 = vsel %vm286, %v1398, %v1397
  %v1400 = vperm.slane %v1360, %v288
  %v1401 = vsel %vm290, %v1400, %v1399
  %v1402 = vperm.slane %v1363, %v292
  %v1403 = vsel %vm294, %v1402, %v1401
  %v1404 = vperm.slane %v1366, %v296
  %v1405 = vsel %vm298, %v1404, %v1403
  %v1406 = vperm.slane %v1369, %v300
  %v1407 = vsel %vm302, %v1406, %v1405
  %v1408 = vperm.slane %v1372, %v304
  %v1409 = vsel %vm306, %v1408, %v1407
  %v1410 = vperm.slane %v1375, %v308
  %v1411 = vsel %vm310, %v1410, %v1409
  %v1412 = vperm.slane %v1378, %v312
  %v1413 = vsel %vm314, %v1412, %v1411
  %v1414 = vperm.slane %v1381, %v316
  %v1415 = vsel %vm318, %v1414, %v1413
  %v1416 = vperm.slane %v1384, %v320
  %v1417 = vsel %vm322, %v1416, %v1415
  %v1418 = vperm.slane %v1387, %v324
  %v1419 = vsel %vm326, %v1418, %v1417
  %v1420 = vperm.slane %v1390, %v328
  %v1421 = vsel %vm330, %v1420, %v1419
  %v1423 = vmul.f32 %v1047, %v1421
  %v1424 = vadd.f32 %v1046, %v1423
  %v1425 = vsub.f32 0.0, %v1424
  %v1426 = vlaneseq
  %v1427 = vshrl.u32 %v1426, 7
  %s1428 = smul.u32 0, 128
  %v1429 = vmul.u32 %v1427, 128
  %v1430 = vstv %s1428
  %v1431 = vadd.s32 %v1430, %v1429
  %v1432 = vadd.s32 %v1431, %v270
  %vm1433 = vcmp.lt.s32.totalorder %v1432, 8
  %v1434 = vsel %vm1433, %v1425, 0.0
  %1435 = vst [vmem:[%s7] sm:$0x1] %v1434
  // Predicated region
  $region26: #{_forward_core_with_loss.1} parent=0 // pred_check
    _
  $region27: #{_forward_core_with_loss.1} parent=0 // pred_check_branch
    %1437 = sbr.rel (0) target = $region29
  $region28: #{_forward_core_with_loss.1} parent=0 // pred_region
    _
  $region29: #{_forward_core_with_loss.1} parent=0 // pred_fallthru
    _
  // Predicated region
  $region30: #{_forward_core_with_loss.1} parent=0 // pred_check
    _
  $region31: #{_forward_core_with_loss.1} parent=0 // pred_check_branch
    %1439 = sbr.rel (0) target = $region33
  $region32: #{_forward_core_with_loss.1} parent=0 // pred_region
    _
  $region33: #{_forward_core_with_loss.1} parent=0 // pred_fallthru
    _
  // Predicated region
  $region34: #{_forward_core_with_loss.1} parent=0 // pred_check
    _
  $region35: #{_forward_core_with_loss.1} parent=0 // pred_check_branch
    %1441 = sbr.rel (0) target = $region37
  $region36: #{_forward_core_with_loss.1} parent=0 // pred_region
    _
  $region37: #{_forward_core_with_loss.1} parent=0 // pred_fallthru
    _
  // Predicated region
  $region38: #{_forward_core_with_loss.1} parent=0 // pred_check
    _
  $region39: #{_forward_core_with_loss.1} parent=0 // pred_check_branch
    %1443 = sbr.rel (0) target = $region41
  $region40: #{_forward_core_with_loss.1} parent=0 // pred_region
    _
  $region41: #{_forward_core_with_loss.1} parent=0 // pred_fallthru
    _

</llo_original>
